<compile_context>
chip_gen: v5e
topology: v5e:2x2
jax: 0.10.0
libtpu: 0.0.40
codegen_flags: <defaults>
</compile_context>

<pallas_src>
import functools

import jax
import jax.numpy as jnp
from jax.experimental import pallas as pl
from jax.experimental.pallas import tpu as pltpu


# ---------------------------------------------------------------------------
# Fused kernel: embedding gather + output projection + online logsumexp
# ---------------------------------------------------------------------------
def _decoder_kernel(tok_ref,       # SMEM (BT,)   int32  scalar-prefetched tokens
                    emb_hbm,       # ANY  (V, D)  f32    embedding table (HBM)
                    w_ref,         # VMEM (D, tn) bf16   output-projection W tile
                    b_ref,         # VMEM (1, tn) f32    output-projection b tile
                    logits_ref,    # VMEM (tm, tn) f32   logits tile (streams out)
                    lse_ref,       # VMEM (tm, 1)  f32   per-row logsumexp (out)
                    gather_ref,    # VMEM (tm, D)  f32   gather landing buffer
                    feat_ref,      # VMEM (tm, D)  bf16  features (cast once/tile)
                    dma_sem,       # DMA semaphore ()
                    m_ref,         # VMEM (tm, 1)  f32   online max
                    l_ref,         # VMEM (tm, 1)  f32   online sum-exp
                    *, tm):
    i = pl.program_id(0)           # row tile
    k = pl.program_id(1)           # vocab tile (innermost / "arbitrary")

    # ---- first vocab step of this row tile: gather tm embedding rows -------
    @pl.when(k == 0)
    def _gather_and_init():
        base = i * tm

        def row_copy(r):
            tok = tok_ref[base + r]
            return pltpu.make_async_copy(
                emb_hbm.at[pl.ds(tok, 1), :],      # one (1, D) row from HBM
                gather_ref.at[pl.ds(r, 1), :],     # into row r of the buffer
                dma_sem)

        @pl.loop(0, tm)
        def _issue(r):                             # keep all tm DMAs in flight
            row_copy(r).start()

        @pl.loop(0, tm)
        def _drain(r):
            row_copy(r).wait()

        # Cast once per row tile; every vocab step reuses the bf16 features.
        feat_ref[...] = gather_ref[...].astype(jnp.bfloat16)
        m_ref[...] = jnp.full_like(m_ref, -jnp.inf)
        l_ref[...] = jnp.zeros_like(l_ref)

    # ---- output_layer for this (row, vocab) tile: bf16 x bf16 -> f32 MXU ---
    logits = jnp.dot(feat_ref[...], w_ref[...],
                     preferred_element_type=jnp.float32) + b_ref[...]
    logits_ref[...] = logits                       # lane-dense streaming store

    # ---- online max / logsumexp across vocab tiles --------------------------
    m_prev = m_ref[...]
    m_new = jnp.maximum(m_prev, jnp.max(logits, axis=-1, keepdims=True))
    alpha = jnp.exp(m_prev - m_new)                # 0 at k == 0
    l_ref[...] = alpha * l_ref[...] + jnp.sum(jnp.exp(logits - m_new),
                                              axis=-1, keepdims=True)
    m_ref[...] = m_new

    @pl.when(k == pl.num_programs(1) - 1)
    def _finalize():
        lse_ref[...] = m_ref[...] + jnp.log(l_ref[...])


# ---------------------------------------------------------------------------
# VMEM budget (generation aware)
# ---------------------------------------------------------------------------
def _vmem_limit_bytes(tm, tn, D):
    lane = 128
    est = (2 * D * tn * 2            # W tiles (bf16, double-buffered)
           + 2 * max(tn, lane) * 4   # bias tiles
           + 2 * tm * tn * 4         # logits output tiles (double-buffered)
           + 2 * tm * lane * 4       # lse output block (lane-padded)
           + tm * D * 4              # f32 gather buffer
           + tm * D * 2              # bf16 feature buffer
           + 2 * tm * lane * 4)      # m / l scratch (lane-padded)
    try:
        cap = int(pltpu.get_tpu_info().vmem_capacity_bytes)
    except Exception:  # pragma: no cover - conservative fallback
        cap = 64 * 1024 * 1024       # <= physical VMEM on every generation
    # Leave ~15% of physical VMEM as headroom for compiler-internal scratch.
    return int(min(max(est + (4 << 20), 16 << 20), int(0.85 * cap)))


# ---------------------------------------------------------------------------
# Wrapper: FairseqDecoder.forward
# ---------------------------------------------------------------------------
def fairseq_incremental_decoder_forward(prev_output_tokens, emb, wout, bout,
                                        *, tile_rows=512, tile_vocab=512,
                                        w_pipeline_buffers=2):
    """forward(prev_output_tokens) -> (logits (B, T, V), extra dict).

    extract_features := embedding gather, fused into the kernel (tokens are
    scalar-prefetched to SMEM and drive per-row async copies from the
    HBM-resident table).  output_layer := tiled linear projection (bf16
    operands, f32 accumulation).  The kernel also carries an online logsumexp
    across vocab tiles, returned in extra["lse"], so get_normalized_probs is a
    single elementwise pass.

    Tiling guidance (W-streaming roofline): tile_rows >= 256 on v5e,
    ~384-512 on v7x, ~768+ on v6e for prefill-sized B*T; must divide B*T.
    Raise w_pipeline_buffers to 3 when the (D, tn) W-tile DMA is the exposed
    latency (small tile_rows, very large D).
    """
    B, T = prev_output_tokens.shape
    V, D = emb.shape
    assert wout.shape == (D, V)
    BT = B * T

    tm = min(tile_rows, BT)
    tn = min(tile_vocab, V)
    assert BT % tm == 0 and V % tn == 0, "pad B*T / V to the chosen tiles"
    assert D % 128 == 0 and tn % 128 == 0, (
        "pad D and the vocab tile to multiples of 128 (lane-dense layouts); "
        "prefer multiples of 256 on v6e/v7x")
    assert tm % 16 == 0, "row tile must be a multiple of 16 (bf16 sublane packing)"

    # Tokens live in SMEM (scalar prefetch); clamp so the gather DMAs can never
    # walk outside the embedding table.
    tokens_flat = jnp.clip(
        prev_output_tokens.reshape(BT).astype(jnp.int32), 0, V - 1)

    emb_f32 = emb.astype(jnp.float32)        # gather source, stays in HBM
    wout_bf16 = wout.astype(jnp.bfloat16)    # 2x MXU rate, half the W traffic
    bout_f32 = bout.reshape(1, V).astype(jnp.float32)

    w_spec_kwargs = {}
    if w_pipeline_buffers != 2:
        w_spec_kwargs["pipeline_mode"] = pl.Buffered(w_pipeline_buffers)

    kernel = functools.partial(_decoder_kernel, tm=tm)
    logits, lse = pl.pallas_call(
        kernel,
        out_shape=(jax.ShapeDtypeStruct((BT, V), jnp.float32),
                   jax.ShapeDtypeStruct((BT, 1), jnp.float32)),
        grid_spec=pltpu.PrefetchScalarGridSpec(
            num_scalar_prefetch=1,
            grid=(BT // tm, V // tn),                               # vocab last
            in_specs=[
                pl.BlockSpec(memory_space=pl.ANY),                  # emb in HBM
                pl.BlockSpec((D, tn), lambda i, k, tok: (0, k),
                             **w_spec_kwargs),                      # W tile
                pl.BlockSpec((1, tn), lambda i, k, tok: (0, k)),    # b tile
            ],
            out_specs=[
                pl.BlockSpec((tm, tn), lambda i, k, tok: (i, k)),   # logits
                pl.BlockSpec((tm, 1), lambda i, k, tok: (i, 0)),    # lse
            ],
            scratch_shapes=[
                pltpu.VMEM((tm, D), jnp.float32),    # gather landing buffer
                pltpu.VMEM((tm, D), jnp.bfloat16),   # bf16 features
                pltpu.SemaphoreType.DMA(()),         # gather completion
                pltpu.VMEM((tm, 1), jnp.float32),    # online max
                pltpu.VMEM((tm, 1), jnp.float32),    # online sum-exp
            ],
        ),
        compiler_params=pltpu.CompilerParams(
            dimension_semantics=("parallel", "arbitrary"),
            vmem_limit_bytes=_vmem_limit_bytes(tm, tn, D)),
    )(tokens_flat, emb_f32, wout_bf16, bout_f32)

    logits = logits.reshape(B, T, V)
    extra = {"lse": lse.reshape(B, T, 1)}    # model-specific outputs
    return logits, extra


def get_normalized_probs(net_output, log_probs=True):
    """FairseqDecoder.get_normalized_probs (non-adaptive-softmax path).

    Reuses the per-row logsumexp the kernel already computed, so log-probs cost
    one elementwise pass over the logits instead of a full log_softmax, and are
    only materialized when actually requested.
    """
    logits, extra = net_output
    logprobs = logits - extra["lse"]
    return logprobs if log_probs else jnp.exp(logprobs)


# TODO(synk): adaptive_softmax branch of get_normalized_probs is not modeled;
#   reorder_incremental_state / set_beam_size / upgrade_state_dict /
#   prepare_for_onnx_export_ are python-side bookkeeping with no tensor compute.
# TODO(synk): for v7x incremental decode (B*T == one row tile) split the vocab
#   axis into two independent halves (one per TensorCore) and merge the partial
#   lse values in the wrapper via log-add-exp to keep both cores busy.


if __name__ == "__main__":
    # Small, 128-aligned demo shapes.
    B, T, D, V = 4, 64, 256, 512

    key = jax.random.PRNGKey(0)
    k_tok, k_emb, k_w, k_b = jax.random.split(key, 4)

    prev_output_tokens = jax.random.randint(k_tok, (B, T), 0, V, dtype=jnp.int32)
    emb = jax.random.normal(k_emb, (V, D), dtype=jnp.float32) * 0.5
    wout = jax.random.normal(k_w, (D, V), dtype=jnp.float32) * 0.5
    bout = jax.random.normal(k_b, (1, V), dtype=jnp.float32) * 0.1

    logits, extra = fairseq_incremental_decoder_forward(
        prev_output_tokens, emb, wout, bout, tile_rows=128, tile_vocab=256)
    logprobs = get_normalized_probs((logits, extra), log_probs=True)
    jax.block_until_ready((logits, logprobs))

    # Pure-JAX reference with the same bf16 operands / f32 accumulation.
    emb_bf16 = emb.astype(jnp.bfloat16)
    wout_bf16 = wout.astype(jnp.bfloat16)
    feats_ref = emb_bf16[prev_output_tokens]                    # (B, T, D) bf16
    logits_ref = jnp.einsum("btd,dv->btv", feats_ref, wout_bf16,
                            preferred_element_type=jnp.float32) + bout[0]
    logprobs_ref = jax.nn.log_softmax(logits_ref, axis=-1)

    assert logits.shape == (B, T, V)
    assert logprobs.shape == (B, T, V)
    assert extra["lse"].shape == (B, T, 1)
    assert jnp.allclose(logits, logits_ref, atol=3e-3, rtol=3e-3), (
        float(jnp.max(jnp.abs(logits - logits_ref))))
    assert jnp.allclose(logprobs, logprobs_ref, atol=3e-3, rtol=3e-3), (
        float(jnp.max(jnp.abs(logprobs - logprobs_ref))))

    print("KERNEL_OK")
</pallas_src>

<mosaic_0001>
module attributes {stable_mosaic.version = 11 : i64} {
  func.func @_decoder_kernel(%arg0: i32, %arg1: i32, %arg2: memref<256xi32, #tpu.memory_space<smem>>, %arg3: memref<512x256xf32, #tpu.memory_space<any>>, %arg4: memref<256x256xbf16, #tpu.memory_space<vmem>>, %arg5: memref<1x256xf32, #tpu.memory_space<vmem>>, %arg6: memref<128x256xf32, #tpu.memory_space<vmem>>, %arg7: memref<128x1xf32, #tpu.memory_space<vmem>>, %arg8: memref<128x256xf32, #tpu.memory_space<vmem>>, %arg9: memref<128x256xbf16, #tpu.memory_space<vmem>>, %arg10: memref<!tpu.dma_semaphore, #tpu.memory_space<semaphore_mem>>, %arg11: memref<128x1xf32, #tpu.memory_space<vmem>>, %arg12: memref<128x1xf32, #tpu.memory_space<vmem>>) attributes {dimension_semantics = [#tpu.dimension_semantics<parallel>, #tpu.dimension_semantics<arbitrary>], iteration_bounds = array<i64: 2, 2>, scalar_prefetch = 1 : i64, scratch_operands = 5 : i64, tpu.core_type = #tpu.core_type<tc>, window_params = [{}, {transform_indices = @transform_1, window_bounds = array<i64: 256, 256>}, {transform_indices = @transform_2, window_bounds = array<i64: 1, 256>}, {transform_indices = @transform_3, window_bounds = array<i64: 128, 256>}, {transform_indices = @transform_4, window_bounds = array<i64: 128, 1>}]} {
    %c0_i32 = arith.constant 0 : i32
    %0 = arith.cmpi eq, %arg1, %c0_i32 : i32
    %1 = arith.extui %0 : i1 to i32
    %c0_i32_0 = arith.constant 0 : i32
    %2 = arith.cmpi ne, %1, %c0_i32_0 : i32
    scf.if %2 {
      %c128_i32 = arith.constant 128 : i32
      %29 = arith.muli %arg0, %c128_i32 : i32
      %c0_i32_19 = arith.constant 0 : i32
      %c128_i32_20 = arith.constant 128 : i32
      %30 = arith.addi %c0_i32_19, %c128_i32_20 : i32
      %c1_i32_21 = arith.constant 1 : i32
      scf.for %arg13 = %c0_i32_19 to %30 step %c1_i32_21  : i32 {
        %c1_i32_37 = arith.constant 1 : i32
        %39 = arith.muli %arg13, %c1_i32_37 : i32
        %c0_i32_38 = arith.constant 0 : i32
        %40 = arith.addi %c0_i32_38, %39 : i32
        %41 = arith.addi %29, %40 : i32
        %42 = arith.index_cast %41 : i32 to index
        %43 = memref.load %arg2[%42] : memref<256xi32, #tpu.memory_space<smem>>
        %c0_i32_39 = arith.constant 0 : i32
        %44 = tpu.memref_slice %arg3[%43, %c0_i32_39] : memref<512x256xf32, #tpu.memory_space<any>> -> memref<1x256xf32, #tpu.memory_space<any>>
        %c0_i32_40 = arith.constant 0 : i32
        %45 = tpu.memref_slice %arg8[%40, %c0_i32_40] : memref<128x256xf32, #tpu.memory_space<vmem>> -> memref<1x256xf32, #tpu.memory_space<vmem>>
        tpu.enqueue_dma source(%44 : memref<1x256xf32, #tpu.memory_space<any>>) target(%45 : memref<1x256xf32, #tpu.memory_space<vmem>>) target_semaphore(%arg10 : memref<!tpu.dma_semaphore, #tpu.memory_space<semaphore_mem>>)
      }
      %c128_i32_22 = arith.constant 128 : i32
      %c0_i32_23 = arith.constant 0 : i32
      %c128_i32_24 = arith.constant 128 : i32
      %31 = arith.addi %c0_i32_23, %c128_i32_24 : i32
      %c1_i32_25 = arith.constant 1 : i32
      scf.for %arg13 = %c0_i32_23 to %31 step %c1_i32_25  : i32 {
        %c1_i32_37 = arith.constant 1 : i32
        %39 = arith.muli %arg13, %c1_i32_37 : i32
        %c0_i32_38 = arith.constant 0 : i32
        %40 = arith.addi %c0_i32_38, %39 : i32
        %41 = arith.addi %29, %40 : i32
        %42 = arith.index_cast %41 : i32 to index
        %43 = memref.load %arg2[%42] : memref<256xi32, #tpu.memory_space<smem>>
        %c0_i32_39 = arith.constant 0 : i32
        %44 = tpu.memref_slice %arg3[%43, %c0_i32_39] : memref<512x256xf32, #tpu.memory_space<any>> -> memref<1x256xf32, #tpu.memory_space<any>>
        %c0_i32_40 = arith.constant 0 : i32
        %45 = tpu.memref_slice %arg8[%40, %c0_i32_40] : memref<128x256xf32, #tpu.memory_space<vmem>> -> memref<1x256xf32, #tpu.memory_space<vmem>>
        tpu.wait_dma2 semaphore(%arg10 : memref<!tpu.dma_semaphore, #tpu.memory_space<semaphore_mem>>) src(%44 : memref<1x256xf32, #tpu.memory_space<any>>) dst(%45 : memref<1x256xf32, #tpu.memory_space<vmem>>)
      }
      %c128_i32_26 = arith.constant 128 : i32
      %c0_27 = arith.constant 0 : index
      %c0_28 = arith.constant 0 : index
      %32 = vector.load %arg8[%c0_27, %c0_28] : memref<128x256xf32, #tpu.memory_space<vmem>>, vector<128x256xf32>
      %33 = arith.truncf %32 : vector<128x256xf32> to vector<128x256xbf16>
      %c0_29 = arith.constant 0 : index
      %c0_30 = arith.constant 0 : index
      %34 = vector.load %arg9[%c0_29, %c0_30] : memref<128x256xbf16, #tpu.memory_space<vmem>>, vector<128x256xbf16>
      tpu.vector_store %arg9[%c0_29, %c0_30], %33 {strides = array<i32>} : memref<128x256xbf16, #tpu.memory_space<vmem>>, vector<128x256xbf16>,
      %cst_31 = arith.constant 0xFF800000 : f32
      %35 = vector.broadcast %cst_31 : f32 to vector<128x1xf32>
      %c0_32 = arith.constant 0 : index
      %c0_33 = arith.constant 0 : index
      %36 = vector.load %arg11[%c0_32, %c0_33] : memref<128x1xf32, #tpu.memory_space<vmem>>, vector<128x1xf32>
      tpu.vector_store %arg11[%c0_32, %c0_33], %35 {strides = array<i32>} : memref<128x1xf32, #tpu.memory_space<vmem>>, vector<128x1xf32>,
      %cst_34 = arith.constant 0.000000e+00 : f32
      %37 = vector.broadcast %cst_34 : f32 to vector<128x1xf32>
      %c0_35 = arith.constant 0 : index
      %c0_36 = arith.constant 0 : index
      %38 = vector.load %arg12[%c0_35, %c0_36] : memref<128x1xf32, #tpu.memory_space<vmem>>, vector<128x1xf32>
      tpu.vector_store %arg12[%c0_35, %c0_36], %37 {strides = array<i32>} : memref<128x1xf32, #tpu.memory_space<vmem>>, vector<128x1xf32>,
    } else {
    }
    %c0 = arith.constant 0 : index
    %c0_1 = arith.constant 0 : index
    %3 = vector.load %arg9[%c0, %c0_1] : memref<128x256xbf16, #tpu.memory_space<vmem>>, vector<128x256xbf16>
    %c0_2 = arith.constant 0 : index
    %c0_3 = arith.constant 0 : index
    %4 = vector.load %arg4[%c0_2, %c0_3] : memref<256x256xbf16, #tpu.memory_space<vmem>>, vector<256x256xbf16>
    %cst = arith.constant dense<0.000000e+00> : vector<128x256xf32>
    %5 = tpu.matmul %3, %4, %cst {dimension_numbers = #tpu.dot_dimension_numbers<[1], [0], [0], [1], [0, 0, 1, 1], [], []>} : vector<128x256xbf16>, vector<256x256xbf16>, vector<128x256xf32> -> vector<128x256xf32>
    %c0_4 = arith.constant 0 : index
    %c0_5 = arith.constant 0 : index
    %6 = vector.load %arg5[%c0_4, %c0_5] : memref<1x256xf32, #tpu.memory_space<vmem>>, vector<1x256xf32>
    %7 = vector.broadcast %6 : vector<1x256xf32> to vector<128x256xf32>
    %8 = arith.addf %5, %7 : vector<128x256xf32>
    %c0_6 = arith.constant 0 : index
    %c0_7 = arith.constant 0 : index
    %9 = vector.load %arg6[%c0_6, %c0_7] : memref<128x256xf32, #tpu.memory_space<vmem>>, vector<128x256xf32>
    tpu.vector_store %arg6[%c0_6, %c0_7], %8 {strides = array<i32>} : memref<128x256xf32, #tpu.memory_space<vmem>>, vector<128x256xf32>,
    %c0_8 = arith.constant 0 : index
    %c0_9 = arith.constant 0 : index
    %10 = vector.load %arg11[%c0_8, %c0_9] : memref<128x1xf32, #tpu.memory_space<vmem>>, vector<128x1xf32>
    %cst_10 = arith.constant dense<0xFF800000> : vector<128xf32>
    %11 = vector.multi_reduction <maximumf>, %8, %cst_10 [1] : vector<128x256xf32> to vector<128xf32>
    %12 = vector.shape_cast %11 : vector<128xf32> to vector<128x1xf32>
    %13 = arith.maximumf %10, %12 : vector<128x1xf32>
    %14 = arith.subf %10, %13 : vector<128x1xf32>
    %15 = math.exp %14 : vector<128x1xf32>
    %c0_11 = arith.constant 0 : index
    %c0_12 = arith.constant 0 : index
    %16 = vector.load %arg12[%c0_11, %c0_12] : memref<128x1xf32, #tpu.memory_space<vmem>>, vector<128x1xf32>
    %17 = arith.mulf %15, %16 : vector<128x1xf32>
    %18 = vector.broadcast %13 : vector<128x1xf32> to vector<128x256xf32>
    %19 = arith.subf %8, %18 : vector<128x256xf32>
    %20 = math.exp %19 : vector<128x256xf32>
    %cst_13 = arith.constant dense<0.000000e+00> : vector<128xf32>
    %21 = vector.multi_reduction <add>, %20, %cst_13 [1] : vector<128x256xf32> to vector<128xf32>
    %22 = vector.shape_cast %21 : vector<128xf32> to vector<128x1xf32>
    %23 = arith.addf %17, %22 : vector<128x1xf32>
    %c0_14 = arith.constant 0 : index
    %c0_15 = arith.constant 0 : index
    %24 = vector.load %arg12[%c0_14, %c0_15] : memref<128x1xf32, #tpu.memory_space<vmem>>, vector<128x1xf32>
    tpu.vector_store %arg12[%c0_14, %c0_15], %23 {strides = array<i32>} : memref<128x1xf32, #tpu.memory_space<vmem>>, vector<128x1xf32>,
    %c0_16 = arith.constant 0 : index
    %c0_17 = arith.constant 0 : index
    %25 = vector.load %arg11[%c0_16, %c0_17] : memref<128x1xf32, #tpu.memory_space<vmem>>, vector<128x1xf32>
    tpu.vector_store %arg11[%c0_16, %c0_17], %13 {strides = array<i32>} : memref<128x1xf32, #tpu.memory_space<vmem>>, vector<128x1xf32>,
    %c1_i32 = arith.constant 1 : i32
    %26 = arith.cmpi eq, %arg1, %c1_i32 : i32
    %27 = arith.extui %26 : i1 to i32
    %c0_i32_18 = arith.constant 0 : i32
    %28 = arith.cmpi ne, %27, %c0_i32_18 : i32
    scf.if %28 {
      %c0_19 = arith.constant 0 : index
      %c0_20 = arith.constant 0 : index
      %29 = vector.load %arg11[%c0_19, %c0_20] : memref<128x1xf32, #tpu.memory_space<vmem>>, vector<128x1xf32>
      %c0_21 = arith.constant 0 : index
      %c0_22 = arith.constant 0 : index
      %30 = vector.load %arg12[%c0_21, %c0_22] : memref<128x1xf32, #tpu.memory_space<vmem>>, vector<128x1xf32>
      %31 = math.log %30 : vector<128x1xf32>
      %32 = arith.addf %29, %31 : vector<128x1xf32>
      %c0_23 = arith.constant 0 : index
      %c0_24 = arith.constant 0 : index
      %33 = vector.load %arg7[%c0_23, %c0_24] : memref<128x1xf32, #tpu.memory_space<vmem>>, vector<128x1xf32>
      tpu.vector_store %arg7[%c0_23, %c0_24], %32 {strides = array<i32>} : memref<128x1xf32, #tpu.memory_space<vmem>>, vector<128x1xf32>,
    } else {
    }
    return
  }
  func.func @transform_1(%arg0: i32, %arg1: i32, %arg2: memref<256xi32, #tpu.memory_space<smem>>) -> (i32, i32) {
    %c0_i32 = arith.constant 0 : i32
    %c0_i32_0 = arith.constant 0 : i32
    return %c0_i32, %arg1 : i32, i32
  }
  func.func @transform_2(%arg0: i32, %arg1: i32, %arg2: memref<256xi32, #tpu.memory_space<smem>>) -> (i32, i32) {
    %c0_i32 = arith.constant 0 : i32
    %c0_i32_0 = arith.constant 0 : i32
    return %c0_i32, %arg1 : i32, i32
  }
  func.func @transform_3(%arg0: i32, %arg1: i32, %arg2: memref<256xi32, #tpu.memory_space<smem>>) -> (i32, i32) {
    %c0_i32 = arith.constant 0 : i32
    return %arg0, %arg1 : i32, i32
  }
  func.func @transform_4(%arg0: i32, %arg1: i32, %arg2: memref<256xi32, #tpu.memory_space<smem>>) -> (i32, i32) {
    %c0_i32 = arith.constant 0 : i32
    %c0_i32_0 = arith.constant 0 : i32
    return %arg0, %c0_i32 : i32, i32
  }
}

</mosaic_0001>

<llo_original>
// kernel: tpu_custom_call.1
$region0: #{tpu_custom_call.1}
  #allocation0 [shape = 'u32[]', space=smem, size = 0x4, offset = 0x4, fixed_abs, tag = 'smem constant byte address 0x4 - core index']
  #allocation1 [shape = 'u32[72,128]{1,0:T(1,128)}', space=vmem, size = 0x9000, scoped, tag = 'internal scratch']
  #allocation2 [shape = 'f32[128,256]{1,0:T(8,128)}', space=vmem, size = 0x20000, scoped, tag = 'scratch operand']
  #allocation3 [shape = 'bf16[128,256]{1,0:T(8,128)(2,1)}', space=vmem, size = 0x10000, scoped, tag = 'scratch operand']
  #allocation4 [shape = 's32[1]{0}', space=sflag, size = 0x4, scoped, tag = 'scratch operand']
  #allocation5 [shape = 'f32[128,1]{1,0:T(8,128)}', space=vmem, size = 0x10000, scoped, tag = 'scratch operand']
  #allocation6 [shape = 'f32[128,1]{1,0:T(8,128)}', space=vmem, size = 0x10000, scoped, tag = 'scratch operand']
  #allocation7 [shape = 's32[1]{0}', space=sflag, size = 0x4, scoped, tag = 'scoped memory for tpu_custom_call.1']
  #allocation8 [shape = 'u8[1024]{0}', space=smem, size = 0x400, scoped, tag = 'prefetched SMEM operand 0']
  #allocation15 [shape = 's32[]', space=sflag, size = 0x4, offset = 0, fixed_abs, tag = 'sflag constant byte address 0x0 - dummy sync flag']
  %s0 = inlined_call_operand.hbm [shape: s32[256], index: 0, kind: input, shape index: {}]
  %s1 = inlined_call_operand.hbm [shape: f32[512,256], index: 1, kind: input, shape index: {}]
  %s2 = inlined_call_operand.hbm [shape: bf16[256,512], index: 2, kind: input, shape index: {}]
  %s3 = inlined_call_operand.hbm [shape: f32[1,512], index: 3, kind: input, shape index: {}]
  %s4 = inlined_call_operand.hbm [shape: f32[256,512], index: 4, kind: output, shape index: {0}]
  %s5 = inlined_call_operand.vmem [shape: f32[256,1], index: 5, kind: output, shape index: {1}]
  %6 = xla_tuple %s4, %s5
  %s7 = sld [smem:[#allocation0]]
  $region79: #{tpu_custom_call.1} parent=0
    _
  %s9 = ssub.s32 1, %s7
  %s10 = scalar_select 0, %s9, %s7
  %s12 = sshll.u32 %s0, 4
  %s13 = int_to_ptr.hbm [resolvable:$true] %s12
  %15 = dma.hbm_to_smem %s13, 32, [#allocation8], [#allocation7]
  %17 = dma.done [#allocation7], 32
  %18 = sfence
  $region1: #{tpu_custom_call.1} parent=0
    #allocation9 [shape = 'u8[262144]{0}', space=vmem, size = 0x40000, scoped, tag = 'input window, operand 2']
    #allocation10 [shape = 's32[2]{0}', space=sflag, size = 0x8, scoped, tag = 'scoped memory for tpu_custom_call.1']
    #allocation11 [shape = 's32[2]{0}', space=sflag, size = 0x8, scoped, tag = 'scoped memory for tpu_custom_call.1']
    #allocation12 [shape = 'u8[2048]{0}', space=vmem, size = 0x800, scoped, tag = 'input window, operand 3']
    #allocation13 [shape = 's32[2]{0}', space=sflag, size = 0x8, scoped, tag = 'scoped memory for tpu_custom_call.1']
    #allocation14 [shape = 'u8[262144]{0}', space=vmem, size = 0x40000, scoped, tag = 'output window, operand 0']
    %19 = vsyncpa [#allocation10], 0
    %s20 = scalar_lea.sflag [#allocation10], 1
    %21 = vsyncpa %s20, 0
    %22 = vsyncpa [#allocation13], 0
    %s23 = scalar_lea.sflag [#allocation13], 1
    %24 = vsyncpa %s23, 0
    %25 = vsyncpa [#allocation11], 0
    %s26 = scalar_lea.sflag [#allocation11], 1
    %27 = vsyncpa %s26, 0
    loop: start=0, step=1, limit=6
    $region2: #{tpu_custom_call.1} parent=1 // loop_pre_header
      _
    $region3: #{tpu_custom_call.1} parent=1 // loop_header
      %s29 = sphi 0, %s33
      %p30 = scmp.ge.s32.totalorder %s29, 6
      %s36 = sphi 0, %s48
      %s37 = sphi 0, %s44
      %s38 = sphi 0, %s36
      %s39 = sphi 0, %s37
      %s40 = sphi 0, %s38
      %s41 = sphi 0, %s39
      %s51 = sphi 0, %s53
      %s54 = sphi 0, %s51
      %s55 = sphi 0, %s54
      %s71 = sphi 0, %s55
      %s77 = sphi 0, %s79
      %s80 = sphi 0, %s77
      %s81 = sphi 0, %s80
      %s97 = sphi 0, %s81
      %s105 = sphi 0, %s107
      %s108 = sphi 0, %s105
      %s109 = sphi 0, %s108
      %s125 = sphi 0, %s109
      %s131 = sphi 0, %s133
      %s134 = sphi 0, %s131
      %s135 = sphi 0, %s134
      %s151 = sphi 0, %s135
    $region4: #{tpu_custom_call.1} parent=1 // loop_header_branch
      %32 = sbr.rel (%p30) target = $region8
    $region5: #{tpu_custom_call.1} parent=1 // loop_body
      %s34 = ssub.s32 %s29, 1
      %s35 = ssub.s32 %s29, 2
      %s42 = sadd.s32 1, %s37
      %p43 = scmp.ge.s32.totalorder %s42, 2
      %s44 = scalar_select %p43, 0, %s42
      %s45 = sadd.s32 1, %s36
      %s46 = scalar_select %p43, %s45, %s36
      %p47 = scmp.ge.s32.totalorder %s46, 2
      %s48 = scalar_select %p47, 0, %s46
      %s49 = ssub.s32 %s37, %s44
      %p50 = scmp.eq.s32.totalorder %s49, 0
      %s52 = sadd.s32 %s51, 1
      %s53 = scalar_select %p50, %s51, %s52
      %p56 = pneg %p50
      %p57 = scmp.eq.s32.totalorder %s29, 3
      %p58 = por %p56, %p57
      %p59 = scmp.ne.s32.totalorder %s51, %s54
      %p60 = scmp.eq.s32.totalorder %s29, 0
      %p61 = por %p59, %p60
      %p62 = scmp.ne.s32.totalorder %s51, %s54
      %p63 = scmp.eq.s32.totalorder %s34, 3
      %p64 = por %p62, %p63
      %p65 = scmp.ne.s32.totalorder %s54, %s55
      %p66 = scmp.eq.s32.totalorder %s34, 0
      %p67 = por %p65, %p66
      %p68 = scmp.ne.s32.totalorder %s54, %s55
      %p69 = scmp.eq.s32.totalorder %s35, 3
      %p70 = por %p68, %p69
      %p72 = scmp.ne.s32.totalorder %s55, %s71
      %p73 = scmp.eq.s32.totalorder %s35, 0
      %p74 = por %p72, %p73
      %s75 = ssub.s32 %s37, %s44
      %p76 = scmp.eq.s32.totalorder %s75, 0
      %s78 = sadd.s32 %s77, 1
      %s79 = scalar_select %p76, %s77, %s78
      %p82 = pneg %p76
      %p83 = scmp.eq.s32.totalorder %s29, 3
      %p84 = por %p82, %p83
      %p85 = scmp.ne.s32.totalorder %s77, %s80
      %p86 = scmp.eq.s32.totalorder %s29, 0
      %p87 = por %p85, %p86
      %p88 = scmp.ne.s32.totalorder %s77, %s80
      %p89 = scmp.eq.s32.totalorder %s34, 3
      %p90 = por %p88, %p89
      %p91 = scmp.ne.s32.totalorder %s80, %s81
      %p92 = scmp.eq.s32.totalorder %s34, 0
      %p93 = por %p91, %p92
      %p94 = scmp.ne.s32.totalorder %s80, %s81
      %p95 = scmp.eq.s32.totalorder %s35, 3
      %p96 = por %p94, %p95
      %p98 = scmp.ne.s32.totalorder %s81, %s97
      %p99 = scmp.eq.s32.totalorder %s35, 0
      %p100 = por %p98, %p99
      %s101 = ssub.s32 %s36, %s48
      %s102 = ssub.s32 %s37, %s44
      %s103 = sor.u32 %s101, %s102
      %p104 = scmp.eq.s32.totalorder %s103, 0
      %s106 = sadd.s32 %s105, 1
      %s107 = scalar_select %p104, %s105, %s106
      %p110 = pneg %p104
      %p111 = scmp.eq.s32.totalorder %s29, 3
      %p112 = por %p110, %p111
      %p113 = scmp.ne.s32.totalorder %s105, %s108
      %p114 = scmp.eq.s32.totalorder %s29, 0
      %p115 = por %p113, %p114
      %p116 = scmp.ne.s32.totalorder %s105, %s108
      %p117 = scmp.eq.s32.totalorder %s34, 3
      %p118 = por %p116, %p117
      %p119 = scmp.ne.s32.totalorder %s108, %s109
      %p120 = scmp.eq.s32.totalorder %s34, 0
      %p121 = por %p119, %p120
      %p122 = scmp.ne.s32.totalorder %s108, %s109
      %p123 = scmp.eq.s32.totalorder %s35, 3
      %p124 = por %p122, %p123
      %p126 = scmp.ne.s32.totalorder %s109, %s125
      %p127 = scmp.eq.s32.totalorder %s35, 0
      %p128 = por %p126, %p127
      %s129 = ssub.s32 %s36, %s48
      %p130 = scmp.eq.s32.totalorder %s129, 0
      %s132 = sadd.s32 %s131, 1
      %s133 = scalar_select %p130, %s131, %s132
      %p136 = pneg %p130
      %p137 = scmp.eq.s32.totalorder %s29, 3
      %p138 = por %p136, %p137
      %p139 = scmp.ne.s32.totalorder %s131, %s134
      %p140 = scmp.eq.s32.totalorder %s29, 0
      %p141 = por %p139, %p140
      %p142 = scmp.ne.s32.totalorder %s131, %s134
      %p143 = scmp.eq.s32.totalorder %s34, 3
      %p144 = por %p142, %p143
      %p145 = scmp.ne.s32.totalorder %s134, %s135
      %p146 = scmp.eq.s32.totalorder %s34, 0
      %p147 = por %p145, %p146
      %p148 = scmp.ne.s32.totalorder %s134, %s135
      %p149 = scmp.eq.s32.totalorder %s35, 3
      %p150 = por %p148, %p149
      %p152 = scmp.ne.s32.totalorder %s135, %s151
      %p153 = scmp.eq.s32.totalorder %s35, 0
      %p154 = por %p152, %p153
      %p155 = scmp.le.s32.totalorder 1, %s29
      %p156 = scmp.lt.s32.totalorder %s29, 5
      %p157 = pnand %p155, %p156
      %p158 = pneg %p157
      // Predicated region
      $region9: #{tpu_custom_call.1} parent=5 // pred_check
        _
      $region10: #{tpu_custom_call.1} parent=5 // pred_check_branch
        %160 = sbr.rel (%p157) target = $region12
      $region11: #{tpu_custom_call.1} parent=5 // pred_region
        %s161 = ssub.s32 %s29, 1
      $region12: #{tpu_custom_call.1} parent=5 // pred_fallthru
        _
      %p162 = scmp.lt.s32.totalorder %s29, 4
      // Predicated region
      $region13: #{tpu_custom_call.1} parent=5 // pred_check
        %p163 = pneg %p162
      $region14: #{tpu_custom_call.1} parent=5 // pred_check_branch
        %165 = sbr.rel (%p163) target = $region16
      $region15: #{tpu_custom_call.1} parent=5 // pred_region
        // Predicated region
        $region17: #{tpu_custom_call.1} parent=15 // pred_check
          %p166 = pneg %p61
        $region18: #{tpu_custom_call.1} parent=15 // pred_check_branch
          %168 = sbr.rel (%p166) target = $region20
        $region19: #{tpu_custom_call.1} parent=15 // pred_region
          %s169 = sand.u32 %s51, 1
          %s170 = scalar_lea.sflag [#allocation10], %s169
          %s171 = sand.u32 %s51, 1
          %s172 = smul.addr %s171, 256
          %s173 = scalar_lea.vmem [#allocation9], %s172
          %s174 = smul.u32 2, %s37
          %176 = vsyncadd %s170, 0
          %s177 = smul.addr %s174, 4
          %s178 = scalar_lea.hbm %s2, %s177
          %s179 = sshll.u32 %s178, 4
          %s180 = int_to_ptr.hbm [resolvable:$true] %s179
          %s181 = sshll.u32 %s173, 4
          %s182 = int_to_ptr.vmem [resolvable:$true] %s181
          %187 = dma.hbm_to_vmem [thread:$0]  %s180, 4096, %s182, %s170, 256, 128, 8
        $region20: #{tpu_custom_call.1} parent=15 // pred_fallthru
          _
        // Predicated region
        $region21: #{tpu_custom_call.1} parent=15 // pred_check
          %p188 = pneg %p87
        $region22: #{tpu_custom_call.1} parent=15 // pred_check_branch
          %190 = sbr.rel (%p188) target = $region24
        $region23: #{tpu_custom_call.1} parent=15 // pred_region
          %s191 = sand.u32 %s77, 1
          %s192 = scalar_lea.sflag [#allocation13], %s191
          %s193 = sand.u32 %s77, 1
          %s194 = smul.addr %s193, 2
          %s195 = scalar_lea.vmem [#allocation12], %s194
          %s196 = smul.u32 2, %s37
          %198 = vsyncadd %s192, 0
          %s199 = scalar_lea.hbm %s3, %s196
          %s201 = sshll.u32 %s199, 4
          %s202 = int_to_ptr.hbm [resolvable:$true] %s201
          %s203 = sshll.u32 %s195, 4
          %s204 = int_to_ptr.vmem [resolvable:$true] %s203
          %206 = dma.hbm_to_vmem [thread:$0]  %s202, 32, %s204, %s192
        $region24: #{tpu_custom_call.1} parent=15 // pred_fallthru
          _
      $region16: #{tpu_custom_call.1} parent=5 // pred_fallthru
        _
      %p207 = scmp.le.s32.totalorder 1, %s29
      %p208 = scmp.lt.s32.totalorder %s29, 5
      %p209 = pnand %p207, %p208
      %p210 = pneg %p209
      // Predicated region
      $region25: #{tpu_custom_call.1} parent=5 // pred_check
        _
      $region26: #{tpu_custom_call.1} parent=5 // pred_check_branch
        %212 = sbr.rel (%p209) target = $region28
      $region27: #{tpu_custom_call.1} parent=5 // pred_region
        %s213 = ssub.s32 %s29, 1
        %s214 = sand.u32 %s54, 1
        %s215 = scalar_lea.sflag [#allocation10], %s214
        %s216 = sand.u32 %s54, 1
        %s217 = smul.addr %s216, 256
        %s218 = scalar_lea.vmem [#allocation9], %s217
        // Predicated region
        $region29: #{tpu_custom_call.1} parent=27 // pred_check
          %p219 = pneg %p67
        $region30: #{tpu_custom_call.1} parent=27 // pred_check_branch
          %221 = sbr.rel (%p219) target = $region32
        $region31: #{tpu_custom_call.1} parent=27 // pred_region
          %223 = dma.done %s215, 4096
        $region32: #{tpu_custom_call.1} parent=27 // pred_fallthru
          _
        %s224 = sand.u32 %s80, 1
        %s225 = scalar_lea.sflag [#allocation13], %s224
        %s226 = sand.u32 %s80, 1
        %s227 = smul.addr %s226, 2
        %s228 = scalar_lea.vmem [#allocation12], %s227
        // Predicated region
        $region33: #{tpu_custom_call.1} parent=27 // pred_check
          %p229 = pneg %p93
        $region34: #{tpu_custom_call.1} parent=27 // pred_check_branch
          %231 = sbr.rel (%p229) target = $region36
        $region35: #{tpu_custom_call.1} parent=27 // pred_region
          %233 = dma.done %s225, 32
        $region36: #{tpu_custom_call.1} parent=27 // pred_fallthru
          _
        %s234 = sand.u32 %s54, 1
        %s235 = scalar_lea.sflag [#allocation10], %s234
        %s236 = sand.u32 %s54, 1
        %s237 = smul.addr %s236, 256
        %s238 = scalar_lea.vmem [#allocation9], %s237
        %p239 = pneg %p67
        %p240 = pneg %p64
        %s241 = sand.u32 %s80, 1
        %s242 = scalar_lea.sflag [#allocation13], %s241
        %s243 = sand.u32 %s80, 1
        %s244 = smul.addr %s243, 2
        %s245 = scalar_lea.vmem [#allocation12], %s244
        %p246 = pneg %p93
        %p247 = pneg %p90
        %p248 = pneg %p121
        %p249 = pneg %p118
        %s250 = sand.u32 %s108, 1
        %s251 = scalar_lea.sflag [#allocation11], %s250
        %s252 = sand.u32 %s108, 1
        %s253 = smul.addr %s252, 256
        %s254 = scalar_lea.vmem [#allocation14], %s253
        %p255 = pneg %p147
        %p256 = pneg %p144
        %s257 = smul.u32 16, %s38
        %p258 = scmp.lt.s32.totalorder %s257, 31
        %s259 = scalar_select %p258, %s257, 31
        %s260 = smul.addr %s259, 8
        %s261 = scalar_lea.vmem %s5, %s260
        %s262 = smul.u32 2, %s39
        %s263 = smul.u32 2, %s39
        %s264 = smul.u32 16, %s38
        %s265 = smul.u32 2, %s39
        %s266 = smul.u32 16, %s38
        %p267 = scmp.lt.s32.totalorder %s266, 31
        %s268 = scalar_select %p267, %s266, 31
        %s269 = smul.addr %s268, 8
        %s270 = scalar_lea.vmem %s5, %s269
        %s271 = smul.u32 16, %s38
        %p272 = scmp.eq.s32.totalorder %s39, 0
        // Predicated region
        $region37: #{tpu_custom_call.1} parent=27 // pred_check
          %p273 = pneg %p272
        $region38: #{tpu_custom_call.1} parent=27 // pred_check_branch
          %275 = sbr.rel (%p273) target = $region40
        $region39: #{tpu_custom_call.1} parent=27 // pred_region
          %s276 = smul.u32 %s38, 128
          loop: start=0, step=1, limit=128
          $region41: #{tpu_custom_call.1} parent=39 // loop_pre_header
            _
          $region42: #{tpu_custom_call.1} parent=39 // loop_header
            %s278 = sphi 0, %s282
            %p279 = scmp.ge.s32.totalorder %s278, 128
          $region43: #{tpu_custom_call.1} parent=39 // loop_header_branch
            %281 = sbr.rel (%p279) target = $region47
          $region44: #{tpu_custom_call.1} parent=39 // loop_body
            %s283 = sadd.s32 %s276, %s278
            %s284 = sld [smem:[#allocation8 + %s283]]
            %s285 = sshrl.u32 %s284, 3
            %s286 = sand.u32 %s284, 7
            %s287 = smul.u32 %s285, 16
            %s288 = sadd.s32 %s286, %s287
            %s289 = scalar_lea.hbm %s1, %s288
            %s290 = sshrl.u32 %s278, 3
            %s291 = sand.u32 %s278, 7
            %s292 = smul.u32 %s290, 16
            %s293 = sadd.s32 %s291, %s292
            %s294 = scalar_lea.vmem [#allocation2], %s293
            %s295 = sshll.u32 %s289, 4
            %s296 = int_to_ptr.hbm [resolvable:$true] %s295
            %s297 = sshll.u32 %s294, 4
            %s298 = int_to_ptr.vmem [resolvable:$true] %s297
            %302 = dma.hbm_to_vmem [thread:$0]  %s296, 32, %s298, [#allocation4], 128, 128, 1
          $region45: #{tpu_custom_call.1} parent=39 // loop_footer
            %s282 = sadd.s32 1, %s278
          $region46: #{tpu_custom_call.1} parent=39 // loop_footer_branch
            %277 = sbr.rel target = $region42
          $region47: #{tpu_custom_call.1} parent=39 // loop_exit
            _
          loop: start=0, step=1, limit=128
          $region48: #{tpu_custom_call.1} parent=39 // loop_pre_header
            _
          $region49: #{tpu_custom_call.1} parent=39 // loop_header
            %s304 = sphi 0, %s308
            %p305 = scmp.ge.s32.totalorder %s304, 128
          $region50: #{tpu_custom_call.1} parent=39 // loop_header_branch
            %307 = sbr.rel (%p305) target = $region54
          $region51: #{tpu_custom_call.1} parent=39 // loop_body
            %s309 = sadd.s32 %s276, %s304
            %s310 = sld [smem:[#allocation8 + %s309]]
            %s311 = smul.u32 1, 2
            %s312 = sshll.u32 %s311, 4
            %313 = dma.done [#allocation4], %s312
          $region52: #{tpu_custom_call.1} parent=39 // loop_footer
            %s308 = sadd.s32 1, %s304
          $region53: #{tpu_custom_call.1} parent=39 // loop_footer_branch
            %303 = sbr.rel target = $region49
          $region54: #{tpu_custom_call.1} parent=39 // loop_exit
            _
          %v314 = vld [vmem:[#allocation2] sm:$0xff]
          %v315 = vld [vmem:[#allocation2 + $0x8] sm:$0xff]
          %v316 = vld [vmem:[#allocation2 + $0x10] sm:$0xff]
          %v317 = vld [vmem:[#allocation2 + $0x18] sm:$0xff]
          %v318 = vld [vmem:[#allocation2 + $0x20] sm:$0xff]
          %v319 = vld [vmem:[#allocation2 + $0x28] sm:$0xff]
          %v320 = vld [vmem:[#allocation2 + $0x30] sm:$0xff]
          %v321 = vld [vmem:[#allocation2 + $0x38] sm:$0xff]
          %v322 = vld [vmem:[#allocation2 + $0x40] sm:$0xff]
          %v323 = vld [vmem:[#allocation2 + $0x48] sm:$0xff]
          %v324 = vld [vmem:[#allocation2 + $0x50] sm:$0xff]
          %v325 = vld [vmem:[#allocation2 + $0x58] sm:$0xff]
          %v326 = vld [vmem:[#allocation2 + $0x60] sm:$0xff]
          %v327 = vld [vmem:[#allocation2 + $0x68] sm:$0xff]
          %v328 = vld [vmem:[#allocation2 + $0x70] sm:$0xff]
          %v329 = vld [vmem:[#allocation2 + $0x78] sm:$0xff]
          %v330 = vld [vmem:[#allocation2 + $0x80] sm:$0xff]
          %v331 = vld [vmem:[#allocation2 + $0x88] sm:$0xff]
          %v332 = vld [vmem:[#allocation2 + $0x90] sm:$0xff]
          %v333 = vld [vmem:[#allocation2 + $0x98] sm:$0xff]
          %v334 = vld [vmem:[#allocation2 + $0xa0] sm:$0xff]
          %v335 = vld [vmem:[#allocation2 + $0xa8] sm:$0xff]
          %v336 = vld [vmem:[#allocation2 + $0xb0] sm:$0xff]
          %v337 = vld [vmem:[#allocation2 + $0xb8] sm:$0xff]
          %v338 = vld [vmem:[#allocation2 + $0xc0] sm:$0xff]
          %v339 = vld [vmem:[#allocation2 + $0xc8] sm:$0xff]
          %v340 = vld [vmem:[#allocation2 + $0xd0] sm:$0xff]
          %v341 = vld [vmem:[#allocation2 + $0xd8] sm:$0xff]
          %v342 = vld [vmem:[#allocation2 + $0xe0] sm:$0xff]
          %v343 = vld [vmem:[#allocation2 + $0xe8] sm:$0xff]
          %v344 = vld [vmem:[#allocation2 + $0xf0] sm:$0xff]
          %v345 = vld [vmem:[#allocation2 + $0xf8] sm:$0xff]
          %v346 = vpack.c.bf16 %v315, %v314
          %v347 = vpack.c.bf16 %v317, %v316
          %v348 = vpack.c.bf16 %v319, %v318
          %v349 = vpack.c.bf16 %v321, %v320
          %v350 = vpack.c.bf16 %v323, %v322
          %v351 = vpack.c.bf16 %v325, %v324
          %v352 = vpack.c.bf16 %v327, %v326
          %v353 = vpack.c.bf16 %v329, %v328
          %v354 = vpack.c.bf16 %v331, %v330
          %v355 = vpack.c.bf16 %v333, %v332
          %v356 = vpack.c.bf16 %v335, %v334
          %v357 = vpack.c.bf16 %v337, %v336
          %v358 = vpack.c.bf16 %v339, %v338
          %v359 = vpack.c.bf16 %v341, %v340
          %v360 = vpack.c.bf16 %v343, %v342
          %v361 = vpack.c.bf16 %v345, %v344
          %362 = vst [vmem:[#allocation3] sm:$0xff] %v346
          %363 = vst [vmem:[#allocation3 + $0x8] sm:$0xff] %v347
          %364 = vst [vmem:[#allocation3 + $0x10] sm:$0xff] %v348
          %365 = vst [vmem:[#allocation3 + $0x18] sm:$0xff] %v349
          %366 = vst [vmem:[#allocation3 + $0x20] sm:$0xff] %v350
          %367 = vst [vmem:[#allocation3 + $0x28] sm:$0xff] %v351
          %368 = vst [vmem:[#allocation3 + $0x30] sm:$0xff] %v352
          %369 = vst [vmem:[#allocation3 + $0x38] sm:$0xff] %v353
          %370 = vst [vmem:[#allocation3 + $0x40] sm:$0xff] %v354
          %371 = vst [vmem:[#allocation3 + $0x48] sm:$0xff] %v355
          %372 = vst [vmem:[#allocation3 + $0x50] sm:$0xff] %v356
          %373 = vst [vmem:[#allocation3 + $0x58] sm:$0xff] %v357
          %374 = vst [vmem:[#allocation3 + $0x60] sm:$0xff] %v358
          %375 = vst [vmem:[#allocation3 + $0x68] sm:$0xff] %v359
          %376 = vst [vmem:[#allocation3 + $0x70] sm:$0xff] %v360
          %377 = vst [vmem:[#allocation3 + $0x78] sm:$0xff] %v361
          %vm378 = vcmask 7168
          %379 = vst.msk [vmem:[#allocation5] sm:$0xff] %vm378, -inf
          %380 = vst.msk [vmem:[#allocation5 + $0x8] sm:$0xff] %vm378, -inf
          %381 = vst.msk [vmem:[#allocation5 + $0x10] sm:$0xff] %vm378, -inf
          %382 = vst.msk [vmem:[#allocation5 + $0x18] sm:$0xff] %vm378, -inf
          %383 = vst.msk [vmem:[#allocation5 + $0x20] sm:$0xff] %vm378, -inf
          %384 = vst.msk [vmem:[#allocation5 + $0x28] sm:$0xff] %vm378, -inf
          %385 = vst.msk [vmem:[#allocation5 + $0x30] sm:$0xff] %vm378, -inf
          %386 = vst.msk [vmem:[#allocation5 + $0x38] sm:$0xff] %vm378, -inf
          %387 = vst.msk [vmem:[#allocation5 + $0x40] sm:$0xff] %vm378, -inf
          %388 = vst.msk [vmem:[#allocation5 + $0x48] sm:$0xff] %vm378, -inf
          %389 = vst.msk [vmem:[#allocation5 + $0x50] sm:$0xff] %vm378, -inf
          %390 = vst.msk [vmem:[#allocation5 + $0x58] sm:$0xff] %vm378, -inf
          %391 = vst.msk [vmem:[#allocation5 + $0x60] sm:$0xff] %vm378, -inf
          %392 = vst.msk [vmem:[#allocation5 + $0x68] sm:$0xff] %vm378, -inf
          %393 = vst.msk [vmem:[#allocation5 + $0x70] sm:$0xff] %vm378, -inf
          %394 = vst.msk [vmem:[#allocation5 + $0x78] sm:$0xff] %vm378, -inf
          %395 = vst.msk [vmem:[#allocation6] sm:$0xff] %vm378, 0.0
          %396 = vst.msk [vmem:[#allocation6 + $0x8] sm:$0xff] %vm378, 0.0
          %397 = vst.msk [vmem:[#allocation6 + $0x10] sm:$0xff] %vm378, 0.0
          %398 = vst.msk [vmem:[#allocation6 + $0x18] sm:$0xff] %vm378, 0.0
          %399 = vst.msk [vmem:[#allocation6 + $0x20] sm:$0xff] %vm378, 0.0
          %400 = vst.msk [vmem:[#allocation6 + $0x28] sm:$0xff] %vm378, 0.0
          %401 = vst.msk [vmem:[#allocation6 + $0x30] sm:$0xff] %vm378, 0.0
          %402 = vst.msk [vmem:[#allocation6 + $0x38] sm:$0xff] %vm378, 0.0
          %403 = vst.msk [vmem:[#allocation6 + $0x40] sm:$0xff] %vm378, 0.0
          %404 = vst.msk [vmem:[#allocation6 + $0x48] sm:$0xff] %vm378, 0.0
          %405 = vst.msk [vmem:[#allocation6 + $0x50] sm:$0xff] %vm378, 0.0
          %406 = vst.msk [vmem:[#allocation6 + $0x58] sm:$0xff] %vm378, 0.0
          %407 = vst.msk [vmem:[#allocation6 + $0x60] sm:$0xff] %vm378, 0.0
          %408 = vst.msk [vmem:[#allocation6 + $0x68] sm:$0xff] %vm378, 0.0
          %409 = vst.msk [vmem:[#allocation6 + $0x70] sm:$0xff] %vm378, 0.0
          %410 = vst.msk [vmem:[#allocation6 + $0x78] sm:$0xff] %vm378, 0.0
        $region40: #{tpu_custom_call.1} parent=27 // pred_fallthru
          _
        %v411 = vld [vmem:[#allocation3] sm:$0xff]
        %v412 = vld [vmem:[#allocation3 + $0x8] sm:$0xff]
        %v413 = vld [vmem:[#allocation3 + $0x10] sm:$0xff]
        %v414 = vld [vmem:[#allocation3 + $0x18] sm:$0xff]
        %v415 = vld [vmem:[#allocation3 + $0x20] sm:$0xff]
        %v416 = vld [vmem:[#allocation3 + $0x28] sm:$0xff]
        %v417 = vld [vmem:[#allocation3 + $0x30] sm:$0xff]
        %v418 = vld [vmem:[#allocation3 + $0x38] sm:$0xff]
        %v419 = vld [vmem:[#allocation3 + $0x40] sm:$0xff]
        %v420 = vld [vmem:[#allocation3 + $0x48] sm:$0xff]
        %v421 = vld [vmem:[#allocation3 + $0x50] sm:$0xff]
        %v422 = vld [vmem:[#allocation3 + $0x58] sm:$0xff]
        %v423 = vld [vmem:[#allocation3 + $0x60] sm:$0xff]
        %v424 = vld [vmem:[#allocation3 + $0x68] sm:$0xff]
        %v425 = vld [vmem:[#allocation3 + $0x70] sm:$0xff]
        %v426 = vld [vmem:[#allocation3 + $0x78] sm:$0xff]
        %v427 = vld [vmem:[%s218] sm:$0xff]
        %v428 = vld [vmem:[%s218 + $0x8] sm:$0xff]
        %v429 = vld [vmem:[%s218 + $0x10] sm:$0xff]
        %v430 = vld [vmem:[%s218 + $0x18] sm:$0xff]
        %v431 = vld [vmem:[%s218 + $0x20] sm:$0xff]
        %v432 = vld [vmem:[%s218 + $0x28] sm:$0xff]
        %v433 = vld [vmem:[%s218 + $0x30] sm:$0xff]
        %v434 = vld [vmem:[%s218 + $0x38] sm:$0xff]
        %v435 = vld [vmem:[%s218 + $0x40] sm:$0xff]
        %v436 = vld [vmem:[%s218 + $0x48] sm:$0xff]
        %v437 = vld [vmem:[%s218 + $0x50] sm:$0xff]
        %v438 = vld [vmem:[%s218 + $0x58] sm:$0xff]
        %v439 = vld [vmem:[%s218 + $0x60] sm:$0xff]
        %v440 = vld [vmem:[%s218 + $0x68] sm:$0xff]
        %v441 = vld [vmem:[%s218 + $0x70] sm:$0xff]
        %v442 = vld [vmem:[%s218 + $0x78] sm:$0xff]
        %v443 = vld [vmem:[%s218 + $0x80] sm:$0xff]
        %v444 = vld [vmem:[%s218 + $0x88] sm:$0xff]
        %v445 = vld [vmem:[%s218 + $0x90] sm:$0xff]
        %v446 = vld [vmem:[%s218 + $0x98] sm:$0xff]
        %v447 = vld [vmem:[%s218 + $0xa0] sm:$0xff]
        %v448 = vld [vmem:[%s218 + $0xa8] sm:$0xff]
        %v449 = vld [vmem:[%s218 + $0xb0] sm:$0xff]
        %v450 = vld [vmem:[%s218 + $0xb8] sm:$0xff]
        %v451 = vld [vmem:[%s218 + $0xc0] sm:$0xff]
        %v452 = vld [vmem:[%s218 + $0xc8] sm:$0xff]
        %v453 = vld [vmem:[%s218 + $0xd0] sm:$0xff]
        %v454 = vld [vmem:[%s218 + $0xd8] sm:$0xff]
        %v455 = vld [vmem:[%s218 + $0xe0] sm:$0xff]
        %v456 = vld [vmem:[%s218 + $0xe8] sm:$0xff]
        %v457 = vld [vmem:[%s218 + $0xf0] sm:$0xff]
        %v458 = vld [vmem:[%s218 + $0xf8] sm:$0xff]
        %v459 = vld [vmem:[%s228] sm:$0x3]
        %v461 = vperm.slane %v459, 0
        %v462 = vperm.slane %v459, 1
        %v481 = vunpack.c.l.b16 %v411
        %v482 = vunpack.c.h.b16 %v411
        %v483 = vunpack.c.l.b16 %v412
        %v484 = vunpack.c.h.b16 %v412
        %v485 = vunpack.c.l.b16 %v413
        %v486 = vunpack.c.h.b16 %v413
        %v487 = vunpack.c.l.b16 %v414
        %v488 = vunpack.c.h.b16 %v414
        %v489 = vunpack.c.l.b16 %v415
        %v490 = vunpack.c.h.b16 %v415
        %v491 = vunpack.c.l.b16 %v416
        %v492 = vunpack.c.h.b16 %v416
        %v493 = vunpack.c.l.b16 %v417
        %v494 = vunpack.c.h.b16 %v417
        %v495 = vunpack.c.l.b16 %v418
        %v496 = vunpack.c.h.b16 %v418
        %v497 = vunpack.c.l.b16 %v419
        %v498 = vunpack.c.h.b16 %v419
        %v499 = vunpack.c.l.b16 %v420
        %v500 = vunpack.c.h.b16 %v420
        %v501 = vunpack.c.l.b16 %v421
        %v502 = vunpack.c.h.b16 %v421
        %v503 = vunpack.c.l.b16 %v422
        %v504 = vunpack.c.h.b16 %v422
        %v505 = vunpack.c.l.b16 %v423
        %v506 = vunpack.c.h.b16 %v423
        %v507 = vunpack.c.l.b16 %v424
        %v508 = vunpack.c.h.b16 %v424
        %v509 = vunpack.c.l.b16 %v425
        %v510 = vunpack.c.h.b16 %v425
        %v511 = vunpack.c.l.b16 %v426
        %v512 = vunpack.c.h.b16 %v426
        %v513 = vpack.c.b16 %v483, %v481
        %v514 = vpack.c.b16 %v484, %v482
        %v515 = vpack.c.b16 %v487, %v485
        %v516 = vpack.c.b16 %v488, %v486
        %v517 = vpack.c.b16 %v491, %v489
        %v518 = vpack.c.b16 %v492, %v490
        %v519 = vpack.c.b16 %v495, %v493
        %v520 = vpack.c.b16 %v496, %v494
        %v521 = vpack.c.b16 %v499, %v497
        %v522 = vpack.c.b16 %v500, %v498
        %v523 = vpack.c.b16 %v503, %v501
        %v524 = vpack.c.b16 %v504, %v502
        %v525 = vpack.c.b16 %v507, %v505
        %v526 = vpack.c.b16 %v508, %v506
        %v527 = vpack.c.b16 %v511, %v509
        %v528 = vpack.c.b16 %v512, %v510
        %v577 = vunpack.c.l.b16 %v427
        %v578 = vunpack.c.h.b16 %v427
        %v579 = vunpack.c.l.b16 %v428
        %v580 = vunpack.c.h.b16 %v428
        %v581 = vunpack.c.l.b16 %v429
        %v582 = vunpack.c.h.b16 %v429
        %v583 = vunpack.c.l.b16 %v430
        %v584 = vunpack.c.h.b16 %v430
        %v585 = vunpack.c.l.b16 %v431
        %v586 = vunpack.c.h.b16 %v431
        %v587 = vunpack.c.l.b16 %v432
        %v588 = vunpack.c.h.b16 %v432
        %v589 = vunpack.c.l.b16 %v433
        %v590 = vunpack.c.h.b16 %v433
        %v591 = vunpack.c.l.b16 %v434
        %v592 = vunpack.c.h.b16 %v434
        %v593 = vunpack.c.l.b16 %v435
        %v594 = vunpack.c.h.b16 %v435
        %v595 = vunpack.c.l.b16 %v436
        %v596 = vunpack.c.h.b16 %v436
        %v597 = vunpack.c.l.b16 %v437
        %v598 = vunpack.c.h.b16 %v437
        %v599 = vunpack.c.l.b16 %v438
        %v600 = vunpack.c.h.b16 %v438
        %v601 = vunpack.c.l.b16 %v439
        %v602 = vunpack.c.h.b16 %v439
        %v603 = vunpack.c.l.b16 %v440
        %v604 = vunpack.c.h.b16 %v440
        %v605 = vunpack.c.l.b16 %v441
        %v606 = vunpack.c.h.b16 %v441
        %v607 = vunpack.c.l.b16 %v442
        %v608 = vunpack.c.h.b16 %v442
        %v609 = vunpack.c.l.b16 %v443
        %v610 = vunpack.c.h.b16 %v443
        %v611 = vunpack.c.l.b16 %v444
        %v612 = vunpack.c.h.b16 %v444
        %v613 = vunpack.c.l.b16 %v445
        %v614 = vunpack.c.h.b16 %v445
        %v615 = vunpack.c.l.b16 %v446
        %v616 = vunpack.c.h.b16 %v446
        %v617 = vunpack.c.l.b16 %v447
        %v618 = vunpack.c.h.b16 %v447
        %v619 = vunpack.c.l.b16 %v448
        %v620 = vunpack.c.h.b16 %v448
        %v621 = vunpack.c.l.b16 %v449
        %v622 = vunpack.c.h.b16 %v449
        %v623 = vunpack.c.l.b16 %v450
        %v624 = vunpack.c.h.b16 %v450
        %v625 = vunpack.c.l.b16 %v451
        %v626 = vunpack.c.h.b16 %v451
        %v627 = vunpack.c.l.b16 %v452
        %v628 = vunpack.c.h.b16 %v452
        %v629 = vunpack.c.l.b16 %v453
        %v630 = vunpack.c.h.b16 %v453
        %v631 = vunpack.c.l.b16 %v454
        %v632 = vunpack.c.h.b16 %v454
        %v633 = vunpack.c.l.b16 %v455
        %v634 = vunpack.c.h.b16 %v455
        %v635 = vunpack.c.l.b16 %v456
        %v636 = vunpack.c.h.b16 %v456
        %v637 = vunpack.c.l.b16 %v457
        %v638 = vunpack.c.h.b16 %v457
        %v639 = vunpack.c.l.b16 %v458
        %v640 = vunpack.c.h.b16 %v458
        %v641 = vpack.c.b16 %v579, %v577
        %v642 = vpack.c.b16 %v580, %v578
        %v643 = vpack.c.b16 %v583, %v581
        %v644 = vpack.c.b16 %v584, %v582
        %v645 = vpack.c.b16 %v587, %v585
        %v646 = vpack.c.b16 %v588, %v586
        %v647 = vpack.c.b16 %v591, %v589
        %v648 = vpack.c.b16 %v592, %v590
        %v649 = vpack.c.b16 %v595, %v593
        %v650 = vpack.c.b16 %v596, %v594
        %v651 = vpack.c.b16 %v599, %v597
        %v652 = vpack.c.b16 %v600, %v598
        %v653 = vpack.c.b16 %v603, %v601
        %v654 = vpack.c.b16 %v604, %v602
        %v655 = vpack.c.b16 %v607, %v605
        %v656 = vpack.c.b16 %v608, %v606
        %v657 = vpack.c.b16 %v611, %v609
        %v658 = vpack.c.b16 %v612, %v610
        %v659 = vpack.c.b16 %v615, %v613
        %v660 = vpack.c.b16 %v616, %v614
        %v661 = vpack.c.b16 %v619, %v617
        %v662 = vpack.c.b16 %v620, %v618
        %v663 = vpack.c.b16 %v623, %v621
        %v664 = vpack.c.b16 %v624, %v622
        %v665 = vpack.c.b16 %v627, %v625
        %v666 = vpack.c.b16 %v628, %v626
        %v667 = vpack.c.b16 %v631, %v629
        %v668 = vpack.c.b16 %v632, %v630
        %v669 = vpack.c.b16 %v635, %v633
        %v670 = vpack.c.b16 %v636, %v634
        %v671 = vpack.c.b16 %v639, %v637
        %v672 = vpack.c.b16 %v640, %v638
        %705 = vmatpush.bf16.msra.mxu0 %v655
        %706 = vmatpush.bf16.msra.mxu0 %v653
        %707 = vmatpush.bf16.msra.mxu0 %v651
        %708 = vmatpush.bf16.msra.mxu0 %v649
        %709 = vmatpush.bf16.msra.mxu0 %v647
        %710 = vmatpush.bf16.msra.mxu0 %v645
        %711 = vmatpush.bf16.msra.mxu0 %v643
        %712 = vmatpush.bf16.msra.mxu0 %v641
        %713 = vmatmul.bf16.gmra.mxu0 %v513
        %v714 = vpop.f32.mrf.mxu0
        %v715 = vadd.f32 %v461, %v714
        %v716 = vpop.f32.mrf.mxu0
        %v717 = vadd.f32 %v461, %v716
        %718 = vmatmul.bf16.gmra.mxu0 %v515
        %v719 = vpop.f32.mrf.mxu0
        %v720 = vadd.f32 %v461, %v719
        %v721 = vpop.f32.mrf.mxu0
        %v722 = vadd.f32 %v461, %v721
        %723 = vmatmul.bf16.gmra.mxu0 %v517
        %v724 = vpop.f32.mrf.mxu0
        %v725 = vadd.f32 %v461, %v724
        %v726 = vpop.f32.mrf.mxu0
        %v727 = vadd.f32 %v461, %v726
        %728 = vmatmul.bf16.gmra.mxu0 %v519
        %v729 = vpop.f32.mrf.mxu0
        %v730 = vadd.f32 %v461, %v729
        %v731 = vpop.f32.mrf.mxu0
        %v732 = vadd.f32 %v461, %v731
        %733 = vmatmul.bf16.gmra.mxu0 %v521
        %v734 = vpop.f32.mrf.mxu0
        %v735 = vadd.f32 %v461, %v734
        %v736 = vpop.f32.mrf.mxu0
        %v737 = vadd.f32 %v461, %v736
        %738 = vmatmul.bf16.gmra.mxu0 %v523
        %v739 = vpop.f32.mrf.mxu0
        %v740 = vadd.f32 %v461, %v739
        %v741 = vpop.f32.mrf.mxu0
        %v742 = vadd.f32 %v461, %v741
        %743 = vmatmul.bf16.gmra.mxu0 %v525
        %v744 = vpop.f32.mrf.mxu0
        %v745 = vadd.f32 %v461, %v744
        %v746 = vpop.f32.mrf.mxu0
        %v747 = vadd.f32 %v461, %v746
        %748 = vmatmul.bf16.gmra.mxu0 %v527
        %v749 = vpop.f32.mrf.mxu0
        %v750 = vadd.f32 %v461, %v749
        %v751 = vpop.f32.mrf.mxu0
        %v752 = vadd.f32 %v461, %v751
        %753 = vdwg.mxu0
        %754 = vmatpush.bf16.msra.mxu0 %v671
        %755 = vmatpush.bf16.msra.mxu0 %v669
        %756 = vmatpush.bf16.msra.mxu0 %v667
        %757 = vmatpush.bf16.msra.mxu0 %v665
        %758 = vmatpush.bf16.msra.mxu0 %v663
        %759 = vmatpush.bf16.msra.mxu0 %v661
        %760 = vmatpush.bf16.msra.mxu0 %v659
        %761 = vmatpush.bf16.msra.mxu0 %v657
        %762 = vmatmul.bf16.gmra.mxu0 %v514
        %v763 = vpop.f32.mrf.mxu0
        %v764 = vadd.f32 %v715, %v763
        %v765 = vpop.f32.mrf.mxu0
        %v766 = vadd.f32 %v717, %v765
        %767 = vmatmul.bf16.gmra.mxu0 %v516
        %v768 = vpop.f32.mrf.mxu0
        %v769 = vadd.f32 %v720, %v768
        %v770 = vpop.f32.mrf.mxu0
        %v771 = vadd.f32 %v722, %v770
        %772 = vmatmul.bf16.gmra.mxu0 %v518
        %v773 = vpop.f32.mrf.mxu0
        %v774 = vadd.f32 %v725, %v773
        %v775 = vpop.f32.mrf.mxu0
        %v776 = vadd.f32 %v727, %v775
        %777 = vmatmul.bf16.gmra.mxu0 %v520
        %v778 = vpop.f32.mrf.mxu0
        %v779 = vadd.f32 %v730, %v778
        %v780 = vpop.f32.mrf.mxu0
        %v781 = vadd.f32 %v732, %v780
        %782 = vmatmul.bf16.gmra.mxu0 %v522
        %v783 = vpop.f32.mrf.mxu0
        %v784 = vadd.f32 %v735, %v783
        %v785 = vpop.f32.mrf.mxu0
        %v786 = vadd.f32 %v737, %v785
        %787 = vmatmul.bf16.gmra.mxu0 %v524
        %v788 = vpop.f32.mrf.mxu0
        %v789 = vadd.f32 %v740, %v788
        %v790 = vpop.f32.mrf.mxu0
        %v791 = vadd.f32 %v742, %v790
        %792 = vmatmul.bf16.gmra.mxu0 %v526
        %v793 = vpop.f32.mrf.mxu0
        %v794 = vadd.f32 %v745, %v793
        %v795 = vpop.f32.mrf.mxu0
        %v796 = vadd.f32 %v747, %v795
        %797 = vmatmul.bf16.gmra.mxu0 %v528
        %v798 = vpop.f32.mrf.mxu0
        %v799 = vadd.f32 %v750, %v798
        %v800 = vpop.f32.mrf.mxu0
        %v801 = vadd.f32 %v752, %v800
        %802 = vdwg.mxu0
        %803 = vmatpush.bf16.msra.mxu0 %v656
        %804 = vmatpush.bf16.msra.mxu0 %v654
        %805 = vmatpush.bf16.msra.mxu0 %v652
        %806 = vmatpush.bf16.msra.mxu0 %v650
        %807 = vmatpush.bf16.msra.mxu0 %v648
        %808 = vmatpush.bf16.msra.mxu0 %v646
        %809 = vmatpush.bf16.msra.mxu0 %v644
        %810 = vmatpush.bf16.msra.mxu0 %v642
        %811 = vmatmul.bf16.gmra.mxu0 %v513
        %v812 = vpop.f32.mrf.mxu0
        %v813 = vadd.f32 %v462, %v812
        %v814 = vpop.f32.mrf.mxu0
        %v815 = vadd.f32 %v462, %v814
        %816 = vmatmul.bf16.gmra.mxu0 %v515
        %v817 = vpop.f32.mrf.mxu0
        %v818 = vadd.f32 %v462, %v817
        %v819 = vpop.f32.mrf.mxu0
        %v820 = vadd.f32 %v462, %v819
        %821 = vmatmul.bf16.gmra.mxu0 %v517
        %v822 = vpop.f32.mrf.mxu0
        %v823 = vadd.f32 %v462, %v822
        %v824 = vpop.f32.mrf.mxu0
        %v825 = vadd.f32 %v462, %v824
        %826 = vmatmul.bf16.gmra.mxu0 %v519
        %v827 = vpop.f32.mrf.mxu0
        %v828 = vadd.f32 %v462, %v827
        %v829 = vpop.f32.mrf.mxu0
        %v830 = vadd.f32 %v462, %v829
        %831 = vmatmul.bf16.gmra.mxu0 %v521
        %v832 = vpop.f32.mrf.mxu0
        %v833 = vadd.f32 %v462, %v832
        %v834 = vpop.f32.mrf.mxu0
        %v835 = vadd.f32 %v462, %v834
        %836 = vmatmul.bf16.gmra.mxu0 %v523
        %v837 = vpop.f32.mrf.mxu0
        %v838 = vadd.f32 %v462, %v837
        %v839 = vpop.f32.mrf.mxu0
        %v840 = vadd.f32 %v462, %v839
        %841 = vmatmul.bf16.gmra.mxu0 %v525
        %v842 = vpop.f32.mrf.mxu0
        %v843 = vadd.f32 %v462, %v842
        %v844 = vpop.f32.mrf.mxu0
        %v845 = vadd.f32 %v462, %v844
        %846 = vmatmul.bf16.gmra.mxu0 %v527
        %v847 = vpop.f32.mrf.mxu0
        %v848 = vadd.f32 %v462, %v847
        %v849 = vpop.f32.mrf.mxu0
        %v850 = vadd.f32 %v462, %v849
        %851 = vdwg.mxu0
        %852 = vmatpush.bf16.msra.mxu0 %v672
        %853 = vmatpush.bf16.msra.mxu0 %v670
        %854 = vmatpush.bf16.msra.mxu0 %v668
        %855 = vmatpush.bf16.msra.mxu0 %v666
        %856 = vmatpush.bf16.msra.mxu0 %v664
        %857 = vmatpush.bf16.msra.mxu0 %v662
        %858 = vmatpush.bf16.msra.mxu0 %v660
        %859 = vmatpush.bf16.msra.mxu0 %v658
        %860 = vmatmul.bf16.gmra.mxu0 %v514
        %v861 = vpop.f32.mrf.mxu0
        %v862 = vadd.f32 %v813, %v861
        %v863 = vpop.f32.mrf.mxu0
        %v864 = vadd.f32 %v815, %v863
        %865 = vmatmul.bf16.gmra.mxu0 %v516
        %v866 = vpop.f32.mrf.mxu0
        %v867 = vadd.f32 %v818, %v866
        %v868 = vpop.f32.mrf.mxu0
        %v869 = vadd.f32 %v820, %v868
        %870 = vmatmul.bf16.gmra.mxu0 %v518
        %v871 = vpop.f32.mrf.mxu0
        %v872 = vadd.f32 %v823, %v871
        %v873 = vpop.f32.mrf.mxu0
        %v874 = vadd.f32 %v825, %v873
        %875 = vmatmul.bf16.gmra.mxu0 %v520
        %v876 = vpop.f32.mrf.mxu0
        %v877 = vadd.f32 %v828, %v876
        %v878 = vpop.f32.mrf.mxu0
        %v879 = vadd.f32 %v830, %v878
        %880 = vmatmul.bf16.gmra.mxu0 %v522
        %v881 = vpop.f32.mrf.mxu0
        %v882 = vadd.f32 %v833, %v881
        %v883 = vpop.f32.mrf.mxu0
        %v884 = vadd.f32 %v835, %v883
        %885 = vmatmul.bf16.gmra.mxu0 %v524
        %v886 = vpop.f32.mrf.mxu0
        %v887 = vadd.f32 %v838, %v886
        %v888 = vpop.f32.mrf.mxu0
        %v889 = vadd.f32 %v840, %v888
        %890 = vmatmul.bf16.gmra.mxu0 %v526
        %v891 = vpop.f32.mrf.mxu0
        %v892 = vadd.f32 %v843, %v891
        %v893 = vpop.f32.mrf.mxu0
        %v894 = vadd.f32 %v845, %v893
        %895 = vmatmul.bf16.gmra.mxu0 %v528
        %v896 = vpop.f32.mrf.mxu0
        %v897 = vadd.f32 %v848, %v896
        %v898 = vpop.f32.mrf.mxu0
        %v899 = vadd.f32 %v850, %v898
        %900 = vdwg.mxu0
        %901 = vst [vmem:[%s254] sm:$0xff] %v764
        %902 = vst [vmem:[%s254 + $0x8] sm:$0xff] %v862
        %903 = vst [vmem:[%s254 + $0x10] sm:$0xff] %v766
        %904 = vst [vmem:[%s254 + $0x18] sm:$0xff] %v864
        %905 = vst [vmem:[%s254 + $0x20] sm:$0xff] %v769
        %906 = vst [vmem:[%s254 + $0x28] sm:$0xff] %v867
        %907 = vst [vmem:[%s254 + $0x30] sm:$0xff] %v771
        %908 = vst [vmem:[%s254 + $0x38] sm:$0xff] %v869
        %909 = vst [vmem:[%s254 + $0x40] sm:$0xff] %v774
        %910 = vst [vmem:[%s254 + $0x48] sm:$0xff] %v872
        %911 = vst [vmem:[%s254 + $0x50] sm:$0xff] %v776
        %912 = vst [vmem:[%s254 + $0x58] sm:$0xff] %v874
        %913 = vst [vmem:[%s254 + $0x60] sm:$0xff] %v779
        %914 = vst [vmem:[%s254 + $0x68] sm:$0xff] %v877
        %915 = vst [vmem:[%s254 + $0x70] sm:$0xff] %v781
        %916 = vst [vmem:[%s254 + $0x78] sm:$0xff] %v879
        %917 = vst [vmem:[%s254 + $0x80] sm:$0xff] %v784
        %918 = vst [vmem:[%s254 + $0x88] sm:$0xff] %v882
        %919 = vst [vmem:[%s254 + $0x90] sm:$0xff] %v786
        %920 = vst [vmem:[%s254 + $0x98] sm:$0xff] %v884
        %921 = vst [vmem:[%s254 + $0xa0] sm:$0xff] %v789
        %922 = vst [vmem:[%s254 + $0xa8] sm:$0xff] %v887
        %923 = vst [vmem:[%s254 + $0xb0] sm:$0xff] %v791
        %924 = vst [vmem:[%s254 + $0xb8] sm:$0xff] %v889
        %925 = vst [vmem:[%s254 + $0xc0] sm:$0xff] %v794
        %926 = vst [vmem:[%s254 + $0xc8] sm:$0xff] %v892
        %927 = vst [vmem:[%s254 + $0xd0] sm:$0xff] %v796
        %928 = vst [vmem:[%s254 + $0xd8] sm:$0xff] %v894
        %929 = vst [vmem:[%s254 + $0xe0] sm:$0xff] %v799
        %930 = vst [vmem:[%s254 + $0xe8] sm:$0xff] %v897
        %931 = vst [vmem:[%s254 + $0xf0] sm:$0xff] %v801
        %932 = vst [vmem:[%s254 + $0xf8] sm:$0xff] %v899
        %v933 = vld [vmem:[#allocation5] sm:$0xff]
        %v934 = vld [vmem:[#allocation5 + $0x8] sm:$0xff]
        %v935 = vld [vmem:[#allocation5 + $0x10] sm:$0xff]
        %v936 = vld [vmem:[#allocation5 + $0x18] sm:$0xff]
        %v937 = vld [vmem:[#allocation5 + $0x20] sm:$0xff]
        %v938 = vld [vmem:[#allocation5 + $0x28] sm:$0xff]
        %v939 = vld [vmem:[#allocation5 + $0x30] sm:$0xff]
        %v940 = vld [vmem:[#allocation5 + $0x38] sm:$0xff]
        %v941 = vld [vmem:[#allocation5 + $0x40] sm:$0xff]
        %v942 = vld [vmem:[#allocation5 + $0x48] sm:$0xff]
        %v943 = vld [vmem:[#allocation5 + $0x50] sm:$0xff]
        %v944 = vld [vmem:[#allocation5 + $0x58] sm:$0xff]
        %v945 = vld [vmem:[#allocation5 + $0x60] sm:$0xff]
        %v946 = vld [vmem:[#allocation5 + $0x68] sm:$0xff]
        %v947 = vld [vmem:[#allocation5 + $0x70] sm:$0xff]
        %v948 = vld [vmem:[#allocation5 + $0x78] sm:$0xff]
        %v949 = vmax.f32 %v764, %v862
        %950 = vmax.xlane.f32.xlu0 %v949
        %v951 = vpop.xlane.xlu0 %950
        %v952 = vmax.f32 %v766, %v864
        %953 = vmax.xlane.f32.xlu0 %v952
        %v954 = vpop.xlane.xlu0 %953
        %v955 = vmax.f32 %v769, %v867
        %956 = vmax.xlane.f32.xlu0 %v955
        %v957 = vpop.xlane.xlu0 %956
        %v958 = vmax.f32 %v771, %v869
        %959 = vmax.xlane.f32.xlu0 %v958
        %v960 = vpop.xlane.xlu0 %959
        %v961 = vmax.f32 %v774, %v872
        %962 = vmax.xlane.f32.xlu0 %v961
        %v963 = vpop.xlane.xlu0 %962
        %v964 = vmax.f32 %v776, %v874
        %965 = vmax.xlane.f32.xlu0 %v964
        %v966 = vpop.xlane.xlu0 %965
        %v967 = vmax.f32 %v779, %v877
        %968 = vmax.xlane.f32.xlu0 %v967
        %v969 = vpop.xlane.xlu0 %968
        %v970 = vmax.f32 %v781, %v879
        %971 = vmax.xlane.f32.xlu0 %v970
        %v972 = vpop.xlane.xlu0 %971
        %v973 = vmax.f32 %v784, %v882
        %974 = vmax.xlane.f32.xlu0 %v973
        %v975 = vpop.xlane.xlu0 %974
        %v976 = vmax.f32 %v786, %v884
        %977 = vmax.xlane.f32.xlu0 %v976
        %v978 = vpop.xlane.xlu0 %977
        %v979 = vmax.f32 %v789, %v887
        %980 = vmax.xlane.f32.xlu0 %v979
        %v981 = vpop.xlane.xlu0 %980
        %v982 = vmax.f32 %v791, %v889
        %983 = vmax.xlane.f32.xlu0 %v982
        %v984 = vpop.xlane.xlu0 %983
        %v985 = vmax.f32 %v794, %v892
        %986 = vmax.xlane.f32.xlu0 %v985
        %v987 = vpop.xlane.xlu0 %986
        %v988 = vmax.f32 %v796, %v894
        %989 = vmax.xlane.f32.xlu0 %v988
        %v990 = vpop.xlane.xlu0 %989
        %v991 = vmax.f32 %v799, %v897
        %992 = vmax.xlane.f32.xlu0 %v991
        %v993 = vpop.xlane.xlu0 %992
        %v994 = vmax.f32 %v801, %v899
        %995 = vmax.xlane.f32.xlu0 %v994
        %v996 = vpop.xlane.xlu0 %995
        %v997 = vmax.f32 %v933, %v951
        %v998 = vmax.f32 %v934, %v954
        %v999 = vmax.f32 %v935, %v957
        %v1000 = vmax.f32 %v936, %v960
        %v1001 = vmax.f32 %v937, %v963
        %v1002 = vmax.f32 %v938, %v966
        %v1003 = vmax.f32 %v939, %v969
        %v1004 = vmax.f32 %v940, %v972
        %v1005 = vmax.f32 %v941, %v975
        %v1006 = vmax.f32 %v942, %v978
        %v1007 = vmax.f32 %v943, %v981
        %v1008 = vmax.f32 %v944, %v984
        %v1009 = vmax.f32 %v945, %v987
        %v1010 = vmax.f32 %v946, %v990
        %v1011 = vmax.f32 %v947, %v993
        %v1012 = vmax.f32 %v948, %v996
        %v1013 = vsub.f32 %v933, %v997
        %v1014 = vsub.f32 %v934, %v998
        %v1015 = vsub.f32 %v935, %v999
        %v1016 = vsub.f32 %v936, %v1000
        %v1017 = vsub.f32 %v937, %v1001
        %v1018 = vsub.f32 %v938, %v1002
        %v1019 = vsub.f32 %v939, %v1003
        %v1020 = vsub.f32 %v940, %v1004
        %v1021 = vsub.f32 %v941, %v1005
        %v1022 = vsub.f32 %v942, %v1006
        %v1023 = vsub.f32 %v943, %v1007
        %v1024 = vsub.f32 %v944, %v1008
        %v1025 = vsub.f32 %v945, %v1009
        %v1026 = vsub.f32 %v946, %v1010
        %v1027 = vsub.f32 %v947, %v1011
        %v1028 = vsub.f32 %v948, %v1012
        %v1029 = vmul.f32 %v1013, 1.442695
        %v1030 = vpow.pop %v1029
        %v1031 = vmul.f32 %v1014, 1.442695
        %v1032 = vpow.pop %v1031
        %v1033 = vmul.f32 %v1015, 1.442695
        %v1034 = vpow.pop %v1033
        %v1035 = vmul.f32 %v1016, 1.442695
        %v1036 = vpow.pop %v1035
        %v1037 = vmul.f32 %v1017, 1.442695
        %v1038 = vpow.pop %v1037
        %v1039 = vmul.f32 %v1018, 1.442695
        %v1040 = vpow.pop %v1039
        %v1041 = vmul.f32 %v1019, 1.442695
        %v1042 = vpow.pop %v1041
        %v1043 = vmul.f32 %v1020, 1.442695
        %v1044 = vpow.pop %v1043
        %v1045 = vmul.f32 %v1021, 1.442695
        %v1046 = vpow.pop %v1045
        %v1047 = vmul.f32 %v1022, 1.442695
        %v1048 = vpow.pop %v1047
        %v1049 = vmul.f32 %v1023, 1.442695
        %v1050 = vpow.pop %v1049
        %v1051 = vmul.f32 %v1024, 1.442695
        %v1052 = vpow.pop %v1051
        %v1053 = vmul.f32 %v1025, 1.442695
        %v1054 = vpow.pop %v1053
        %v1055 = vmul.f32 %v1026, 1.442695
        %v1056 = vpow.pop %v1055
        %v1057 = vmul.f32 %v1027, 1.442695
        %v1058 = vpow.pop %v1057
        %v1059 = vmul.f32 %v1028, 1.442695
        %v1060 = vpow.pop %v1059
        %v1061 = vld [vmem:[#allocation6] sm:$0xff]
        %v1062 = vld [vmem:[#allocation6 + $0x8] sm:$0xff]
        %v1063 = vld [vmem:[#allocation6 + $0x10] sm:$0xff]
        %v1064 = vld [vmem:[#allocation6 + $0x18] sm:$0xff]
        %v1065 = vld [vmem:[#allocation6 + $0x20] sm:$0xff]
        %v1066 = vld [vmem:[#allocation6 + $0x28] sm:$0xff]
        %v1067 = vld [vmem:[#allocation6 + $0x30] sm:$0xff]
        %v1068 = vld [vmem:[#allocation6 + $0x38] sm:$0xff]
        %v1069 = vld [vmem:[#allocation6 + $0x40] sm:$0xff]
        %v1070 = vld [vmem:[#allocation6 + $0x48] sm:$0xff]
        %v1071 = vld [vmem:[#allocation6 + $0x50] sm:$0xff]
        %v1072 = vld [vmem:[#allocation6 + $0x58] sm:$0xff]
        %v1073 = vld [vmem:[#allocation6 + $0x60] sm:$0xff]
        %v1074 = vld [vmem:[#allocation6 + $0x68] sm:$0xff]
        %v1075 = vld [vmem:[#allocation6 + $0x70] sm:$0xff]
        %v1076 = vld [vmem:[#allocation6 + $0x78] sm:$0xff]
        %v1077 = vmul.f32 %v1030, %v1061
        %v1078 = vmul.f32 %v1032, %v1062
        %v1079 = vmul.f32 %v1034, %v1063
        %v1080 = vmul.f32 %v1036, %v1064
        %v1081 = vmul.f32 %v1038, %v1065
        %v1082 = vmul.f32 %v1040, %v1066
        %v1083 = vmul.f32 %v1042, %v1067
        %v1084 = vmul.f32 %v1044, %v1068
        %v1085 = vmul.f32 %v1046, %v1069
        %v1086 = vmul.f32 %v1048, %v1070
        %v1087 = vmul.f32 %v1050, %v1071
        %v1088 = vmul.f32 %v1052, %v1072
        %v1089 = vmul.f32 %v1054, %v1073
        %v1090 = vmul.f32 %v1056, %v1074
        %v1091 = vmul.f32 %v1058, %v1075
        %v1092 = vmul.f32 %v1060, %v1076
        %1094 = vset.pattern.permute.xlu0 0
        %1095 = vperm.xlu0 %1094, %v997
        %v1096 = vpop.permute.xlu0 %1095
        %1099 = vset.pattern.permute.xlu0 0
        %1100 = vperm.xlu0 %1099, %v998
        %v1101 = vpop.permute.xlu0 %1100
        %1104 = vset.pattern.permute.xlu0 0
        %1105 = vperm.xlu0 %1104, %v999
        %v1106 = vpop.permute.xlu0 %1105
        %1109 = vset.pattern.permute.xlu0 0
        %1110 = vperm.xlu0 %1109, %v1000
        %v1111 = vpop.permute.xlu0 %1110
        %1114 = vset.pattern.permute.xlu0 0
        %1115 = vperm.xlu0 %1114, %v1001
        %v1116 = vpop.permute.xlu0 %1115
        %1119 = vset.pattern.permute.xlu0 0
        %1120 = vperm.xlu0 %1119, %v1002
        %v1121 = vpop.permute.xlu0 %1120
        %1124 = vset.pattern.permute.xlu0 0
        %1125 = vperm.xlu0 %1124, %v1003
        %v1126 = vpop.permute.xlu0 %1125
        %1129 = vset.pattern.permute.xlu0 0
        %1130 = vperm.xlu0 %1129, %v1004
        %v1131 = vpop.permute.xlu0 %1130
        %1134 = vset.pattern.permute.xlu0 0
        %1135 = vperm.xlu0 %1134, %v1005
        %v1136 = vpop.permute.xlu0 %1135
        %1139 = vset.pattern.permute.xlu0 0
        %1140 = vperm.xlu0 %1139, %v1006
        %v1141 = vpop.permute.xlu0 %1140
        %1144 = vset.pattern.permute.xlu0 0
        %1145 = vperm.xlu0 %1144, %v1007
        %v1146 = vpop.permute.xlu0 %1145
        %1149 = vset.pattern.permute.xlu0 0
        %1150 = vperm.xlu0 %1149, %v1008
        %v1151 = vpop.permute.xlu0 %1150
        %1154 = vset.pattern.permute.xlu0 0
        %1155 = vperm.xlu0 %1154, %v1009
        %v1156 = vpop.permute.xlu0 %1155
        %1159 = vset.pattern.permute.xlu0 0
        %1160 = vperm.xlu0 %1159, %v1010
        %v1161 = vpop.permute.xlu0 %1160
        %1164 = vset.pattern.permute.xlu0 0
        %1165 = vperm.xlu0 %1164, %v1011
        %v1166 = vpop.permute.xlu0 %1165
        %1169 = vset.pattern.permute.xlu0 0
        %1170 = vperm.xlu0 %1169, %v1012
        %v1171 = vpop.permute.xlu0 %1170
        %v1173 = vsub.f32 %v764, %v1096
        %v1174 = vsub.f32 %v862, %v1096
        %v1175 = vsub.f32 %v766, %v1101
        %v1176 = vsub.f32 %v864, %v1101
        %v1177 = vsub.f32 %v769, %v1106
        %v1178 = vsub.f32 %v867, %v1106
        %v1179 = vsub.f32 %v771, %v1111
        %v1180 = vsub.f32 %v869, %v1111
        %v1181 = vsub.f32 %v774, %v1116
        %v1182 = vsub.f32 %v872, %v1116
        %v1183 = vsub.f32 %v776, %v1121
        %v1184 = vsub.f32 %v874, %v1121
        %v1185 = vsub.f32 %v779, %v1126
        %v1186 = vsub.f32 %v877, %v1126
        %v1187 = vsub.f32 %v781, %v1131
        %v1188 = vsub.f32 %v879, %v1131
        %v1189 = vsub.f32 %v784, %v1136
        %v1190 = vsub.f32 %v882, %v1136
        %v1191 = vsub.f32 %v786, %v1141
        %v1192 = vsub.f32 %v884, %v1141
        %v1193 = vsub.f32 %v789, %v1146
        %v1194 = vsub.f32 %v887, %v1146
        %v1195 = vsub.f32 %v791, %v1151
        %v1196 = vsub.f32 %v889, %v1151
        %v1197 = vsub.f32 %v794, %v1156
        %v1198 = vsub.f32 %v892, %v1156
        %v1199 = vsub.f32 %v796, %v1161
        %v1200 = vsub.f32 %v894, %v1161
        %v1201 = vsub.f32 %v799, %v1166
        %v1202 = vsub.f32 %v897, %v1166
        %v1203 = vsub.f32 %v801, %v1171
        %v1204 = vsub.f32 %v899, %v1171
        %v1205 = vmul.f32 %v1173, 1.442695
        %v1206 = vpow.pop %v1205
        %v1207 = vmul.f32 %v1174, 1.442695
        %v1208 = vpow.pop %v1207
        %v1209 = vmul.f32 %v1175, 1.442695
        %v1210 = vpow.pop %v1209
        %v1211 = vmul.f32 %v1176, 1.442695
        %v1212 = vpow.pop %v1211
        %v1213 = vmul.f32 %v1177, 1.442695
        %v1214 = vpow.pop %v1213
        %v1215 = vmul.f32 %v1178, 1.442695
        %v1216 = vpow.pop %v1215
        %v1217 = vmul.f32 %v1179, 1.442695
        %v1218 = vpow.pop %v1217
        %v1219 = vmul.f32 %v1180, 1.442695
        %v1220 = vpow.pop %v1219
        %v1221 = vmul.f32 %v1181, 1.442695
        %v1222 = vpow.pop %v1221
        %v1223 = vmul.f32 %v1182, 1.442695
        %v1224 = vpow.pop %v1223
        %v1225 = vmul.f32 %v1183, 1.442695
        %v1226 = vpow.pop %v1225
        %v1227 = vmul.f32 %v1184, 1.442695
        %v1228 = vpow.pop %v1227
        %v1229 = vmul.f32 %v1185, 1.442695
        %v1230 = vpow.pop %v1229
        %v1231 = vmul.f32 %v1186, 1.442695
        %v1232 = vpow.pop %v1231
        %v1233 = vmul.f32 %v1187, 1.442695
        %v1234 = vpow.pop %v1233
        %v1235 = vmul.f32 %v1188, 1.442695
        %v1236 = vpow.pop %v1235
        %v1237 = vmul.f32 %v1189, 1.442695
        %v1238 = vpow.pop %v1237
        %v1239 = vmul.f32 %v1190, 1.442695
        %v1240 = vpow.pop %v1239
        %v1241 = vmul.f32 %v1191, 1.442695
        %v1242 = vpow.pop %v1241
        %v1243 = vmul.f32 %v1192, 1.442695
        %v1244 = vpow.pop %v1243
        %v1245 = vmul.f32 %v1193, 1.442695
        %v1246 = vpow.pop %v1245
        %v1247 = vmul.f32 %v1194, 1.442695
        %v1248 = vpow.pop %v1247
        %v1249 = vmul.f32 %v1195, 1.442695
        %v1250 = vpow.pop %v1249
        %v1251 = vmul.f32 %v1196, 1.442695
        %v1252 = vpow.pop %v1251
        %v1253 = vmul.f32 %v1197, 1.442695
        %v1254 = vpow.pop %v1253
        %v1255 = vmul.f32 %v1198, 1.442695
        %v1256 = vpow.pop %v1255
        %v1257 = vmul.f32 %v1199, 1.442695
        %v1258 = vpow.pop %v1257
        %v1259 = vmul.f32 %v1200, 1.442695
        %v1260 = vpow.pop %v1259
        %v1261 = vmul.f32 %v1201, 1.442695
        %v1262 = vpow.pop %v1261
        %v1263 = vmul.f32 %v1202, 1.442695
        %v1264 = vpow.pop %v1263
        %v1265 = vmul.f32 %v1203, 1.442695
        %v1266 = vpow.pop %v1265
        %v1267 = vmul.f32 %v1204, 1.442695
        %v1268 = vpow.pop %v1267
        %v1269 = vadd.f32 %v1206, %v1208
        %1270 = vadd.xlane.f32.xlu0 %v1269
        %v1271 = vpop.xlane.xlu0 %1270
        %v1272 = vadd.f32 %v1210, %v1212
        %1273 = vadd.xlane.f32.xlu0 %v1272
        %v1274 = vpop.xlane.xlu0 %1273
        %v1275 = vadd.f32 %v1214, %v1216
        %1276 = vadd.xlane.f32.xlu0 %v1275
        %v1277 = vpop.xlane.xlu0 %1276
        %v1278 = vadd.f32 %v1218, %v1220
        %1279 = vadd.xlane.f32.xlu0 %v1278
        %v1280 = vpop.xlane.xlu0 %1279
        %v1281 = vadd.f32 %v1222, %v1224
        %1282 = vadd.xlane.f32.xlu0 %v1281
        %v1283 = vpop.xlane.xlu0 %1282
        %v1284 = vadd.f32 %v1226, %v1228
        %1285 = vadd.xlane.f32.xlu0 %v1284
        %v1286 = vpop.xlane.xlu0 %1285
        %v1287 = vadd.f32 %v1230, %v1232
        %1288 = vadd.xlane.f32.xlu0 %v1287
        %v1289 = vpop.xlane.xlu0 %1288
        %v1290 = vadd.f32 %v1234, %v1236
        %1291 = vadd.xlane.f32.xlu0 %v1290
        %v1292 = vpop.xlane.xlu0 %1291
        %v1293 = vadd.f32 %v1238, %v1240
        %1294 = vadd.xlane.f32.xlu0 %v1293
        %v1295 = vpop.xlane.xlu0 %1294
        %v1296 = vadd.f32 %v1242, %v1244
        %1297 = vadd.xlane.f32.xlu0 %v1296
        %v1298 = vpop.xlane.xlu0 %1297
        %v1299 = vadd.f32 %v1246, %v1248
        %1300 = vadd.xlane.f32.xlu0 %v1299
        %v1301 = vpop.xlane.xlu0 %1300
        %v1302 = vadd.f32 %v1250, %v1252
        %1303 = vadd.xlane.f32.xlu0 %v1302
        %v1304 = vpop.xlane.xlu0 %1303
        %v1305 = vadd.f32 %v1254, %v1256
        %1306 = vadd.xlane.f32.xlu0 %v1305
        %v1307 = vpop.xlane.xlu0 %1306
        %v1308 = vadd.f32 %v1258, %v1260
        %1309 = vadd.xlane.f32.xlu0 %v1308
        %v1310 = vpop.xlane.xlu0 %1309
        %v1311 = vadd.f32 %v1262, %v1264
        %1312 = vadd.xlane.f32.xlu0 %v1311
        %v1313 = vpop.xlane.xlu0 %1312
        %v1314 = vadd.f32 %v1266, %v1268
        %1315 = vadd.xlane.f32.xlu0 %v1314
        %v1316 = vpop.xlane.xlu0 %1315
        %v1317 = vadd.f32 %v1077, %v1271
        %v1318 = vadd.f32 %v1078, %v1274
        %v1319 = vadd.f32 %v1079, %v1277
        %v1320 = vadd.f32 %v1080, %v1280
        %v1321 = vadd.f32 %v1081, %v1283
        %v1322 = vadd.f32 %v1082, %v1286
        %v1323 = vadd.f32 %v1083, %v1289
        %v1324 = vadd.f32 %v1084, %v1292
        %v1325 = vadd.f32 %v1085, %v1295
        %v1326 = vadd.f32 %v1086, %v1298
        %v1327 = vadd.f32 %v1087, %v1301
        %v1328 = vadd.f32 %v1088, %v1304
        %v1329 = vadd.f32 %v1089, %v1307
        %v1330 = vadd.f32 %v1090, %v1310
        %v1331 = vadd.f32 %v1091, %v1313
        %v1332 = vadd.f32 %v1092, %v1316
        %vm1333 = vcmask 7168
        %1334 = vst.msk [vmem:[#allocation6] sm:$0xff] %vm1333, %v1317
        %1335 = vst.msk [vmem:[#allocation6 + $0x8] sm:$0xff] %vm1333, %v1318
        %1336 = vst.msk [vmem:[#allocation6 + $0x10] sm:$0xff] %vm1333, %v1319
        %1337 = vst.msk [vmem:[#allocation6 + $0x18] sm:$0xff] %vm1333, %v1320
        %1338 = vst.msk [vmem:[#allocation6 + $0x20] sm:$0xff] %vm1333, %v1321
        %1339 = vst.msk [vmem:[#allocation6 + $0x28] sm:$0xff] %vm1333, %v1322
        %1340 = vst.msk [vmem:[#allocation6 + $0x30] sm:$0xff] %vm1333, %v1323
        %1341 = vst.msk [vmem:[#allocation6 + $0x38] sm:$0xff] %vm1333, %v1324
        %1342 = vst.msk [vmem:[#allocation6 + $0x40] sm:$0xff] %vm1333, %v1325
        %1343 = vst.msk [vmem:[#allocation6 + $0x48] sm:$0xff] %vm1333, %v1326
        %1344 = vst.msk [vmem:[#allocation6 + $0x50] sm:$0xff] %vm1333, %v1327
        %1345 = vst.msk [vmem:[#allocation6 + $0x58] sm:$0xff] %vm1333, %v1328
        %1346 = vst.msk [vmem:[#allocation6 + $0x60] sm:$0xff] %vm1333, %v1329
        %1347 = vst.msk [vmem:[#allocation6 + $0x68] sm:$0xff] %vm1333, %v1330
        %1348 = vst.msk [vmem:[#allocation6 + $0x70] sm:$0xff] %vm1333, %v1331
        %1349 = vst.msk [vmem:[#allocation6 + $0x78] sm:$0xff] %vm1333, %v1332
        %1350 = vst.msk [vmem:[#allocation5] sm:$0xff] %vm1333, %v997
        %1351 = vst.msk [vmem:[#allocation5 + $0x8] sm:$0xff] %vm1333, %v998
        %1352 = vst.msk [vmem:[#allocation5 + $0x10] sm:$0xff] %vm1333, %v999
        %1353 = vst.msk [vmem:[#allocation5 + $0x18] sm:$0xff] %vm1333, %v1000
        %1354 = vst.msk [vmem:[#allocation5 + $0x20] sm:$0xff] %vm1333, %v1001
        %1355 = vst.msk [vmem:[#allocation5 + $0x28] sm:$0xff] %vm1333, %v1002
        %1356 = vst.msk [vmem:[#allocation5 + $0x30] sm:$0xff] %vm1333, %v1003
        %1357 = vst.msk [vmem:[#allocation5 + $0x38] sm:$0xff] %vm1333, %v1004
        %1358 = vst.msk [vmem:[#allocation5 + $0x40] sm:$0xff] %vm1333, %v1005
        %1359 = vst.msk [vmem:[#allocation5 + $0x48] sm:$0xff] %vm1333, %v1006
        %1360 = vst.msk [vmem:[#allocation5 + $0x50] sm:$0xff] %vm1333, %v1007
        %1361 = vst.msk [vmem:[#allocation5 + $0x58] sm:$0xff] %vm1333, %v1008
        %1362 = vst.msk [vmem:[#allocation5 + $0x60] sm:$0xff] %vm1333, %v1009
        %1363 = vst.msk [vmem:[#allocation5 + $0x68] sm:$0xff] %vm1333, %v1010
        %1364 = vst.msk [vmem:[#allocation5 + $0x70] sm:$0xff] %vm1333, %v1011
        %1365 = vst.msk [vmem:[#allocation5 + $0x78] sm:$0xff] %vm1333, %v1012
        %p1366 = scmp.eq.s32.totalorder %s39, 1
        // Predicated region
        $region55: #{tpu_custom_call.1} parent=27 // pred_check
          %p1367 = pneg %p1366
        $region56: #{tpu_custom_call.1} parent=27 // pred_check_branch
          %1369 = sbr.rel (%p1367) target = $region58
        $region57: #{tpu_custom_call.1} parent=27 // pred_region
          %v1370 = vld [vmem:[#allocation5] sm:$0xff]
          %v1371 = vld [vmem:[#allocation5 + $0x8] sm:$0xff]
          %v1372 = vld [vmem:[#allocation5 + $0x10] sm:$0xff]
          %v1373 = vld [vmem:[#allocation5 + $0x18] sm:$0xff]
          %v1374 = vld [vmem:[#allocation5 + $0x20] sm:$0xff]
          %v1375 = vld [vmem:[#allocation5 + $0x28] sm:$0xff]
          %v1376 = vld [vmem:[#allocation5 + $0x30] sm:$0xff]
          %v1377 = vld [vmem:[#allocation5 + $0x38] sm:$0xff]
          %v1378 = vld [vmem:[#allocation5 + $0x40] sm:$0xff]
          %v1379 = vld [vmem:[#allocation5 + $0x48] sm:$0xff]
          %v1380 = vld [vmem:[#allocation5 + $0x50] sm:$0xff]
          %v1381 = vld [vmem:[#allocation5 + $0x58] sm:$0xff]
          %v1382 = vld [vmem:[#allocation5 + $0x60] sm:$0xff]
          %v1383 = vld [vmem:[#allocation5 + $0x68] sm:$0xff]
          %v1384 = vld [vmem:[#allocation5 + $0x70] sm:$0xff]
          %v1385 = vld [vmem:[#allocation5 + $0x78] sm:$0xff]
          %v1386 = vld [vmem:[#allocation6] sm:$0xff]
          %v1387 = vld [vmem:[#allocation6 + $0x8] sm:$0xff]
          %v1388 = vld [vmem:[#allocation6 + $0x10] sm:$0xff]
          %v1389 = vld [vmem:[#allocation6 + $0x18] sm:$0xff]
          %v1390 = vld [vmem:[#allocation6 + $0x20] sm:$0xff]
          %v1391 = vld [vmem:[#allocation6 + $0x28] sm:$0xff]
          %v1392 = vld [vmem:[#allocation6 + $0x30] sm:$0xff]
          %v1393 = vld [vmem:[#allocation6 + $0x38] sm:$0xff]
          %v1394 = vld [vmem:[#allocation6 + $0x40] sm:$0xff]
          %v1395 = vld [vmem:[#allocation6 + $0x48] sm:$0xff]
          %v1396 = vld [vmem:[#allocation6 + $0x50] sm:$0xff]
          %v1397 = vld [vmem:[#allocation6 + $0x58] sm:$0xff]
          %v1398 = vld [vmem:[#allocation6 + $0x60] sm:$0xff]
          %v1399 = vld [vmem:[#allocation6 + $0x68] sm:$0xff]
          %v1400 = vld [vmem:[#allocation6 + $0x70] sm:$0xff]
          %v1401 = vld [vmem:[#allocation6 + $0x78] sm:$0xff]
          %v1402 = vlog2.pop %v1386
          %v1403 = vmul.f32 %v1402, 0.6931472
          %v1404 = vlog2.pop %v1387
          %v1405 = vmul.f32 %v1404, 0.6931472
          %v1406 = vlog2.pop %v1388
          %v1407 = vmul.f32 %v1406, 0.6931472
          %v1408 = vlog2.pop %v1389
          %v1409 = vmul.f32 %v1408, 0.6931472
          %v1410 = vlog2.pop %v1390
          %v1411 = vmul.f32 %v1410, 0.6931472
          %v1412 = vlog2.pop %v1391
          %v1413 = vmul.f32 %v1412, 0.6931472
          %v1414 = vlog2.pop %v1392
          %v1415 = vmul.f32 %v1414, 0.6931472
          %v1416 = vlog2.pop %v1393
          %v1417 = vmul.f32 %v1416, 0.6931472
          %v1418 = vlog2.pop %v1394
          %v1419 = vmul.f32 %v1418, 0.6931472
          %v1420 = vlog2.pop %v1395
          %v1421 = vmul.f32 %v1420, 0.6931472
          %v1422 = vlog2.pop %v1396
          %v1423 = vmul.f32 %v1422, 0.6931472
          %v1424 = vlog2.pop %v1397
          %v1425 = vmul.f32 %v1424, 0.6931472
          %v1426 = vlog2.pop %v1398
          %v1427 = vmul.f32 %v1426, 0.6931472
          %v1428 = vlog2.pop %v1399
          %v1429 = vmul.f32 %v1428, 0.6931472
          %v1430 = vlog2.pop %v1400
          %v1431 = vmul.f32 %v1430, 0.6931472
          %v1432 = vlog2.pop %v1401
          %v1433 = vmul.f32 %v1432, 0.6931472
          %v1434 = vadd.f32 %v1370, %v1403
          %v1435 = vadd.f32 %v1371, %v1405
          %v1436 = vadd.f32 %v1372, %v1407
          %v1437 = vadd.f32 %v1373, %v1409
          %v1438 = vadd.f32 %v1374, %v1411
          %v1439 = vadd.f32 %v1375, %v1413
          %v1440 = vadd.f32 %v1376, %v1415
          %v1441 = vadd.f32 %v1377, %v1417
          %v1442 = vadd.f32 %v1378, %v1419
          %v1443 = vadd.f32 %v1379, %v1421
          %v1444 = vadd.f32 %v1380, %v1423
          %v1445 = vadd.f32 %v1381, %v1425
          %v1446 = vadd.f32 %v1382, %v1427
          %v1447 = vadd.f32 %v1383, %v1429
          %v1448 = vadd.f32 %v1384, %v1431
          %v1449 = vadd.f32 %v1385, %v1433
          %1450 = vst.msk [vmem:[%s270] sm:$0xff] %vm1333, %v1434
          %1451 = vst.msk [vmem:[%s270 + $0x8] sm:$0xff] %vm1333, %v1435
          %1452 = vst.msk [vmem:[%s270 + $0x10] sm:$0xff] %vm1333, %v1436
          %1453 = vst.msk [vmem:[%s270 + $0x18] sm:$0xff] %vm1333, %v1437
          %1454 = vst.msk [vmem:[%s270 + $0x20] sm:$0xff] %vm1333, %v1438
          %1455 = vst.msk [vmem:[%s270 + $0x28] sm:$0xff] %vm1333, %v1439
          %1456 = vst.msk [vmem:[%s270 + $0x30] sm:$0xff] %vm1333, %v1440
          %1457 = vst.msk [vmem:[%s270 + $0x38] sm:$0xff] %vm1333, %v1441
          %1458 = vst.msk [vmem:[%s270 + $0x40] sm:$0xff] %vm1333, %v1442
          %1459 = vst.msk [vmem:[%s270 + $0x48] sm:$0xff] %vm1333, %v1443
          %1460 = vst.msk [vmem:[%s270 + $0x50] sm:$0xff] %vm1333, %v1444
          %1461 = vst.msk [vmem:[%s270 + $0x58] sm:$0xff] %vm1333, %v1445
          %1462 = vst.msk [vmem:[%s270 + $0x60] sm:$0xff] %vm1333, %v1446
          %1463 = vst.msk [vmem:[%s270 + $0x68] sm:$0xff] %vm1333, %v1447
          %1464 = vst.msk [vmem:[%s270 + $0x70] sm:$0xff] %vm1333, %v1448
          %1465 = vst.msk [vmem:[%s270 + $0x78] sm:$0xff] %vm1333, %v1449
        $region58: #{tpu_custom_call.1} parent=27 // pred_fallthru
          _
        %s1466 = sand.u32 %s108, 1
        %s1467 = scalar_lea.sflag [#allocation11], %s1466
        %s1468 = sand.u32 %s108, 1
        %s1469 = smul.addr %s1468, 256
        %s1470 = scalar_lea.vmem [#allocation14], %s1469
        %s1471 = smul.u32 16, %s38
        %p1472 = scmp.lt.s32.totalorder %s1471, 31
        %s1473 = scalar_select %p1472, %s1471, 31
        %s1474 = smul.addr %s1473, 8
        %s1475 = scalar_lea.vmem %s5, %s1474
        // Predicated region
        $region59: #{tpu_custom_call.1} parent=27 // pred_check
          %p1476 = pneg %p118
        $region60: #{tpu_custom_call.1} parent=27 // pred_check_branch
          %1478 = sbr.rel (%p1476) target = $region62
        $region61: #{tpu_custom_call.1} parent=27 // pred_region
          %s1479 = smul.u32 16, %s38
          %s1480 = smul.u32 2, %s39
          %1482 = vsyncadd %s1467, 0
          %s1483 = smul.addr %s1479, 4
          %s1484 = sadd.s32 %s1480, %s1483
          %s1485 = smul.addr %s1484, 8
          %s1486 = scalar_lea.hbm %s4, %s1485
          %s1487 = sshll.u32 %s1470, 4
          %s1488 = int_to_ptr.vmem [resolvable:$true] %s1487
          %s1489 = sshll.u32 %s1486, 4
          %s1490 = int_to_ptr.hbm [resolvable:$true] %s1489
          %1495 = dma.vmem_to_hbm [thread:$0]  %s1488, 4096, %s1490, %s1467, 256, 512, 16
        $region62: #{tpu_custom_call.1} parent=27 // pred_fallthru
          _
        // Predicated region
        $region63: #{tpu_custom_call.1} parent=27 // pred_check
          %p1496 = pneg %p144
        $region64: #{tpu_custom_call.1} parent=27 // pred_check_branch
          %1498 = sbr.rel (%p1496) target = $region66
        $region65: #{tpu_custom_call.1} parent=27 // pred_region
          %s1499 = smul.u32 16, %s38
        $region66: #{tpu_custom_call.1} parent=27 // pred_fallthru
          _
      $region28: #{tpu_custom_call.1} parent=5 // pred_fallthru
        _
      %p1500 = scmp.le.s32.totalorder 2, %s29
      // Predicated region
      $region67: #{tpu_custom_call.1} parent=5 // pred_check
        %p1501 = pneg %p1500
      $region68: #{tpu_custom_call.1} parent=5 // pred_check_branch
        %1503 = sbr.rel (%p1501) target = $region70
      $region69: #{tpu_custom_call.1} parent=5 // pred_region
        %s1504 = ssub.s32 %s29, 2
        // Predicated region
        $region71: #{tpu_custom_call.1} parent=69 // pred_check
          %p1505 = pneg %p124
        $region72: #{tpu_custom_call.1} parent=69 // pred_check_branch
          %1507 = sbr.rel (%p1505) target = $region74
        $region73: #{tpu_custom_call.1} parent=69 // pred_region
          %s1508 = sand.u32 %s109, 1
          %s1509 = scalar_lea.sflag [#allocation11], %s1508
          %s1510 = sand.u32 %s109, 1
          %s1511 = smul.addr %s1510, 256
          %s1512 = scalar_lea.vmem [#allocation14], %s1511
          %1514 = dma.done %s1509, 4096
        $region74: #{tpu_custom_call.1} parent=69 // pred_fallthru
          _
        // Predicated region
        $region75: #{tpu_custom_call.1} parent=69 // pred_check
          %p1515 = pneg %p150
        $region76: #{tpu_custom_call.1} parent=69 // pred_check_branch
          %1517 = sbr.rel (%p1515) target = $region78
        $region77: #{tpu_custom_call.1} parent=69 // pred_region
          %s1518 = smul.u32 16, %s40
          %p1519 = scmp.lt.s32.totalorder %s1518, 31
          %s1520 = scalar_select %p1519, %s1518, 31
          %s1521 = smul.addr %s1520, 8
          %s1522 = scalar_lea.vmem %s5, %s1521
        $region78: #{tpu_custom_call.1} parent=69 // pred_fallthru
          _
      $region70: #{tpu_custom_call.1} parent=5 // pred_fallthru
        _
    $region6: #{tpu_custom_call.1} parent=1 // loop_footer
      %s33 = sadd.s32 1, %s29
    $region7: #{tpu_custom_call.1} parent=1 // loop_footer_branch
      %28 = sbr.rel target = $region3
    $region8: #{tpu_custom_call.1} parent=1 // loop_exit
      _
    %1523 = vsyncpa [#allocation10], 1
    %s1524 = scalar_lea.sflag [#allocation10], 1
    %1525 = vsyncpa %s1524, 1
    %1526 = vsyncpa [#allocation13], 1
    %s1527 = scalar_lea.sflag [#allocation13], 1
    %1528 = vsyncpa %s1527, 1
    %1529 = vsyncpa [#allocation11], 1
    %s1530 = scalar_lea.sflag [#allocation11], 1
    %1531 = vsyncpa %s1530, 1
  %1532 = vsyncmov [#allocation4]
  %s1533 = vpop.sfrf %1532
  %p1534 = scmp.eq.s32.totalorder %s1533, 0
  %p1535 = pneg %p1534
  %1537 = shalt.err (%p1535)

</llo_original>
